<compile_context>
chip_gen: v5e
topology: v5e:2x2
jax: 0.10.0
libtpu: 0.0.40
codegen_flags: <defaults>
</compile_context>

<pallas_src>
import jax
import jax.numpy as jnp
from jax.experimental import pallas as pl
from jax.experimental.pallas import tpu as pltpu

_LANE = 128


def _round_up(x, m):
    return ((x + m - 1) // m) * m


def twl_mlp_kernel(x_ref, w0_ref, w1_ref, w2_ref, b_ref, wo_ref, bo_ref, o_ref):
    """Fused MLP tile: 3x (bf16 matmul -> +bias(f32) -> ReLU) + output matmul."""
    h = x_ref[...]                      # already bf16 (host pre-cast)
    biases = b_ref[...]                 # (3, H_PAD) f32, BN + bias pre-folded
    for li, w_ref in enumerate((w0_ref, w1_ref, w2_ref)):
        acc = jnp.dot(h, w_ref[...], preferred_element_type=jnp.float32)
        acc = acc + biases[li:li + 1, :]            # f32 epilogue
        h = jnp.maximum(acc, 0.0).astype(jnp.bfloat16)
    out = jnp.dot(h, wo_ref[...], preferred_element_type=jnp.float32) + bo_ref[...]
    o_ref[...] = out.astype(o_ref.dtype)            # bf16 store (lane-dense)


def init_params(key, input_size, hidden_size, output_size):
    """PyTorch-equivalent parameters (Linear + BatchNorm1d running stats)."""
    layers = []
    in_f = input_size
    for _ in range(3):
        key, kw, kb, kg, kbe, km, kv = jax.random.split(key, 7)
        bound = 1.0 / float(in_f) ** 0.5
        layers.append(dict(
            w=jax.random.uniform(kw, (in_f, hidden_size), jnp.float32, -bound, bound),
            b=jax.random.uniform(kb, (hidden_size,), jnp.float32, -bound, bound),
            gamma=jax.random.uniform(kg, (hidden_size,), jnp.float32, 0.5, 1.5),
            beta=0.1 * jax.random.normal(kbe, (hidden_size,), jnp.float32),
            mean=0.1 * jax.random.normal(km, (hidden_size,), jnp.float32),
            var=jax.random.uniform(kv, (hidden_size,), jnp.float32, 0.5, 1.5),
        ))
        in_f = hidden_size
    key, kw, kb = jax.random.split(key, 3)
    bound = 1.0 / float(hidden_size) ** 0.5
    wo = jax.random.uniform(kw, (hidden_size, output_size), jnp.float32, -bound, bound)
    bo = jax.random.uniform(kb, (output_size,), jnp.float32, -bound, bound)
    return dict(layers=layers, wo=wo, bo=bo)


def fold_and_pad_params(params, input_size, eps=1e-5):
    """Fold BN(eval)+bias into weights; pad in/hidden/out dims; cast W to bf16."""
    hidden_size = params["layers"][0]["w"].shape[1]
    h_pad = _round_up(hidden_size, _LANE)        # keep 128; don't chase MXU fill
    in_pad = _round_up(input_size, 32)           # bf16 sublane multiple
    ws, bs = [], []
    for li, layer in enumerate(params["layers"]):
        scale = layer["gamma"] / jnp.sqrt(layer["var"] + eps)
        shift = layer["beta"] - layer["mean"] * scale
        w_f = layer["w"] * scale[None, :]
        b_f = layer["b"] * scale + shift
        rows = in_pad if li == 0 else h_pad
        w_p = jnp.zeros((rows, h_pad), jnp.float32)
        w_p = w_p.at[: layer["w"].shape[0], :hidden_size].set(w_f)
        b_p = jnp.zeros((h_pad,), jnp.float32).at[:hidden_size].set(b_f)
        ws.append(w_p.astype(jnp.bfloat16))
        bs.append(b_p)
    b_packed = jnp.stack(bs, axis=0)             # (3, h_pad): one DMA, not six
    wo = params["wo"]
    out_size = wo.shape[1]
    out_pad = _round_up(out_size, _LANE)
    wo_p = jnp.zeros((h_pad, out_pad), jnp.float32).at[:hidden_size, :out_size].set(wo)
    bo_p = jnp.zeros((1, out_pad), jnp.float32).at[0, :out_size].set(params["bo"])
    return dict(
        w0=ws[0], w1=ws[1], w2=ws[2], b_packed=b_packed,
        wo=wo_p.astype(jnp.bfloat16), bo=bo_p,
        in_pad=in_pad, h_pad=h_pad, out_pad=out_pad, out_size=out_size,
    )


def _pick_tile_b(batch, in_pad, out_pad, vmem_budget=24 << 20, cap=4096):
    """VMEM-budget-driven batch tile (multiple of 128, grid >= 2 when possible)."""
    per_row = (
        2 * 2 * in_pad        # x bf16, double-buffered
        + 2 * 2 * out_pad     # out bf16, double-buffered
        + 2 * _LANE           # hidden activations (bf16)
        + 4 * _LANE           # hidden f32 accumulator
        + 4 * out_pad         # output f32 accumulator
    )
    tile = min(cap, max(_LANE, vmem_budget // per_row))
    tile = max(_LANE, (tile // _LANE) * _LANE)
    b128 = _round_up(batch, _LANE)
    if b128 >= 2 * _LANE:
        # keep at least 2 grid steps so both v7x TensorCores get work
        tile = min(tile, max(_LANE, (b128 // 2) // _LANE * _LANE))
    return min(tile, b128)


def twl_forward(x, kp):
    batch, input_size = x.shape
    in_pad, h_pad = kp["in_pad"], kp["h_pad"]
    out_pad, out_size = kp["out_pad"], kp["out_size"]

    tile_b = _pick_tile_b(batch, in_pad, out_pad)
    b_pad = _round_up(batch, tile_b)
    grid = (b_pad // tile_b,)

    # Host-side prep: bf16 cast + zero-pad batch rows and input features.
    x_p = jnp.zeros((b_pad, in_pad), jnp.bfloat16)
    x_p = x_p.at[:batch, :input_size].set(x.astype(jnp.bfloat16))

    flops = 2 * b_pad * (in_pad * h_pad + 2 * h_pad * h_pad + h_pad * out_pad)
    weight_keys = ("w0", "w1", "w2", "b_packed", "wo", "bo")
    bytes_accessed = (x_p.size * 2 + sum(kp[k].nbytes for k in weight_keys)
                      + b_pad * out_pad * 2)

    def _resident(shape):
        # constant index_map + single buffer: weights stay put, no dead VMEM
        return pl.BlockSpec(shape, lambda i: (0,) * len(shape),
                            pipeline_mode=pl.Buffered(1))

    out = pl.pallas_call(
        twl_mlp_kernel,
        out_shape=jax.ShapeDtypeStruct((b_pad, out_pad), jnp.bfloat16),
        grid=grid,
        in_specs=[
            pl.BlockSpec((tile_b, in_pad), lambda i: (i, 0)),
            _resident(kp["w0"].shape),
            _resident(kp["w1"].shape),
            _resident(kp["w2"].shape),
            _resident(kp["b_packed"].shape),
            _resident(kp["wo"].shape),
            _resident(kp["bo"].shape),
        ],
        out_specs=pl.BlockSpec((tile_b, out_pad), lambda i: (i, 0)),
        compiler_params=pltpu.CompilerParams(
            dimension_semantics=("parallel",),
            vmem_limit_bytes=48 << 20,   # < v7x 64 MiB physical, > default scoped
        ),
        cost_estimate=pl.CostEstimate(
            flops=flops, transcendentals=0, bytes_accessed=bytes_accessed),
    )(x_p, kp["w0"], kp["w1"], kp["w2"], kp["b_packed"], kp["wo"], kp["bo"])

    return out[:batch, :out_size]   # strip batch / output padding


def reference_forward(x, params, eps=1e-5):
    """Pure-JAX f32 reference with eval-mode BatchNorm1d semantics."""
    h = x
    for layer in params["layers"]:
        h = h @ layer["w"] + layer["b"]
        h = (h - layer["mean"]) / jnp.sqrt(layer["var"] + eps) * layer["gamma"] \
            + layer["beta"]
        h = jnp.maximum(h, 0.0)
    return h @ params["wo"] + params["bo"]


if __name__ == "__main__":
    INPUT_SIZE = 25      # module default
    HIDDEN_SIZE = 64     # module default (padded to 128 inside the wrapper)
    OUTPUT_SIZE = 1000   # module default (padded to 1024 inside the wrapper)
    BATCH = 500          # not a multiple of 128: exercises host-side padding

    key = jax.random.PRNGKey(0)
    key, kx = jax.random.split(key)
    x = jax.random.normal(kx, (BATCH, INPUT_SIZE), jnp.float32)
    params = init_params(key, INPUT_SIZE, HIDDEN_SIZE, OUTPUT_SIZE)
    kp = fold_and_pad_params(params, INPUT_SIZE)

    out = jax.block_until_ready(twl_forward(x, kp))
    ref = reference_forward(x, params)

    assert out.shape == (BATCH, OUTPUT_SIZE), out.shape
    out_f32 = out.astype(jnp.float32)
    max_err = float(jnp.max(jnp.abs(out_f32 - ref)))
    assert jnp.allclose(out_f32, ref, atol=7e-2, rtol=5e-2), \
        f"mismatch vs reference (max abs err {max_err})"
    print("KERNEL_OK")
</pallas_src>

<mosaic_0001>
module attributes {stable_mosaic.version = 11 : i64} {
  func.func @twl_mlp_kernel(%arg0: i32, %arg1: memref<256x32xbf16, #tpu.memory_space<vmem>>, %arg2: memref<32x128xbf16, #tpu.memory_space<vmem>>, %arg3: memref<128x128xbf16, #tpu.memory_space<vmem>>, %arg4: memref<128x128xbf16, #tpu.memory_space<vmem>>, %arg5: memref<3x128xf32, #tpu.memory_space<vmem>>, %arg6: memref<128x1024xbf16, #tpu.memory_space<vmem>>, %arg7: memref<1x1024xf32, #tpu.memory_space<vmem>>, %arg8: memref<256x1024xbf16, #tpu.memory_space<vmem>>) attributes {dimension_semantics = [#tpu.dimension_semantics<parallel>], iteration_bounds = array<i64: 2>, scalar_prefetch = 0 : i64, scratch_operands = 0 : i64, tpu.core_type = #tpu.core_type<tc>, window_params = [{transform_indices = @transform_0, window_bounds = array<i64: 256, 32>}, {pipeline_mode = #tpu.pipeline_mode<synchronous>, transform_indices = @transform_1, window_bounds = array<i64: 32, 128>}, {pipeline_mode = #tpu.pipeline_mode<synchronous>, transform_indices = @transform_2, window_bounds = array<i64: 128, 128>}, {pipeline_mode = #tpu.pipeline_mode<synchronous>, transform_indices = @transform_3, window_bounds = array<i64: 128, 128>}, {pipeline_mode = #tpu.pipeline_mode<synchronous>, transform_indices = @transform_4, window_bounds = array<i64: 3, 128>}, {pipeline_mode = #tpu.pipeline_mode<synchronous>, transform_indices = @transform_5, window_bounds = array<i64: 128, 1024>}, {pipeline_mode = #tpu.pipeline_mode<synchronous>, transform_indices = @transform_6, window_bounds = array<i64: 1, 1024>}, {transform_indices = @transform_7, window_bounds = array<i64: 256, 1024>}]} {
    %c0 = arith.constant 0 : index
    %c0_0 = arith.constant 0 : index
    %0 = vector.load %arg1[%c0, %c0_0] : memref<256x32xbf16, #tpu.memory_space<vmem>>, vector<256x32xbf16>
    %c0_1 = arith.constant 0 : index
    %c0_2 = arith.constant 0 : index
    %1 = vector.load %arg5[%c0_1, %c0_2] : memref<3x128xf32, #tpu.memory_space<vmem>>, vector<3x128xf32>
    %c0_3 = arith.constant 0 : index
    %c0_4 = arith.constant 0 : index
    %2 = vector.load %arg2[%c0_3, %c0_4] : memref<32x128xbf16, #tpu.memory_space<vmem>>, vector<32x128xbf16>
    %cst = arith.constant dense<0.000000e+00> : vector<256x128xf32>
    %3 = tpu.matmul %0, %2, %cst {dimension_numbers = #tpu.dot_dimension_numbers<[1], [0], [0], [1], [0, 0, 1, 1], [], []>} : vector<256x32xbf16>, vector<32x128xbf16>, vector<256x128xf32> -> vector<256x128xf32>
    %4 = vector.extract_strided_slice %1 {offsets = [0, 0], sizes = [1, 128], strides = [1, 1]} : vector<3x128xf32> to vector<1x128xf32>
    %5 = vector.broadcast %4 : vector<1x128xf32> to vector<256x128xf32>
    %6 = arith.addf %3, %5 : vector<256x128xf32>
    %cst_5 = arith.constant 0.000000e+00 : f32
    %7 = vector.broadcast %cst_5 : f32 to vector<256x128xf32>
    %8 = arith.maximumf %6, %7 : vector<256x128xf32>
    %9 = arith.truncf %8 : vector<256x128xf32> to vector<256x128xbf16>
    %c0_6 = arith.constant 0 : index
    %c0_7 = arith.constant 0 : index
    %10 = vector.load %arg3[%c0_6, %c0_7] : memref<128x128xbf16, #tpu.memory_space<vmem>>, vector<128x128xbf16>
    %cst_8 = arith.constant dense<0.000000e+00> : vector<256x128xf32>
    %11 = tpu.matmul %9, %10, %cst_8 {dimension_numbers = #tpu.dot_dimension_numbers<[1], [0], [0], [1], [0, 0, 1, 1], [], []>} : vector<256x128xbf16>, vector<128x128xbf16>, vector<256x128xf32> -> vector<256x128xf32>
    %12 = vector.extract_strided_slice %1 {offsets = [1, 0], sizes = [1, 128], strides = [1, 1]} : vector<3x128xf32> to vector<1x128xf32>
    %13 = vector.broadcast %12 : vector<1x128xf32> to vector<256x128xf32>
    %14 = arith.addf %11, %13 : vector<256x128xf32>
    %cst_9 = arith.constant 0.000000e+00 : f32
    %15 = vector.broadcast %cst_9 : f32 to vector<256x128xf32>
    %16 = arith.maximumf %14, %15 : vector<256x128xf32>
    %17 = arith.truncf %16 : vector<256x128xf32> to vector<256x128xbf16>
    %c0_10 = arith.constant 0 : index
    %c0_11 = arith.constant 0 : index
    %18 = vector.load %arg4[%c0_10, %c0_11] : memref<128x128xbf16, #tpu.memory_space<vmem>>, vector<128x128xbf16>
    %cst_12 = arith.constant dense<0.000000e+00> : vector<256x128xf32>
    %19 = tpu.matmul %17, %18, %cst_12 {dimension_numbers = #tpu.dot_dimension_numbers<[1], [0], [0], [1], [0, 0, 1, 1], [], []>} : vector<256x128xbf16>, vector<128x128xbf16>, vector<256x128xf32> -> vector<256x128xf32>
    %20 = vector.extract_strided_slice %1 {offsets = [2, 0], sizes = [1, 128], strides = [1, 1]} : vector<3x128xf32> to vector<1x128xf32>
    %21 = vector.broadcast %20 : vector<1x128xf32> to vector<256x128xf32>
    %22 = arith.addf %19, %21 : vector<256x128xf32>
    %cst_13 = arith.constant 0.000000e+00 : f32
    %23 = vector.broadcast %cst_13 : f32 to vector<256x128xf32>
    %24 = arith.maximumf %22, %23 : vector<256x128xf32>
    %25 = arith.truncf %24 : vector<256x128xf32> to vector<256x128xbf16>
    %c0_14 = arith.constant 0 : index
    %c0_15 = arith.constant 0 : index
    %26 = vector.load %arg6[%c0_14, %c0_15] : memref<128x1024xbf16, #tpu.memory_space<vmem>>, vector<128x1024xbf16>
    %cst_16 = arith.constant dense<0.000000e+00> : vector<256x1024xf32>
    %27 = tpu.matmul %25, %26, %cst_16 {dimension_numbers = #tpu.dot_dimension_numbers<[1], [0], [0], [1], [0, 0, 1, 1], [], []>} : vector<256x128xbf16>, vector<128x1024xbf16>, vector<256x1024xf32> -> vector<256x1024xf32>
    %c0_17 = arith.constant 0 : index
    %c0_18 = arith.constant 0 : index
    %28 = vector.load %arg7[%c0_17, %c0_18] : memref<1x1024xf32, #tpu.memory_space<vmem>>, vector<1x1024xf32>
    %29 = vector.broadcast %28 : vector<1x1024xf32> to vector<256x1024xf32>
    %30 = arith.addf %27, %29 : vector<256x1024xf32>
    %31 = arith.truncf %30 : vector<256x1024xf32> to vector<256x1024xbf16>
    %c0_19 = arith.constant 0 : index
    %c0_20 = arith.constant 0 : index
    %32 = vector.load %arg8[%c0_19, %c0_20] : memref<256x1024xbf16, #tpu.memory_space<vmem>>, vector<256x1024xbf16>
    tpu.vector_store %arg8[%c0_19, %c0_20], %31 {strides = array<i32>} : memref<256x1024xbf16, #tpu.memory_space<vmem>>, vector<256x1024xbf16>,
    return
  }
  func.func @transform_0(%arg0: i32) -> (i32, i32) {
    %c0_i32 = arith.constant 0 : i32
    %c0_i32_0 = arith.constant 0 : i32
    return %arg0, %c0_i32 : i32, i32
  }
  func.func @transform_1(%arg0: i32) -> (i32, i32) {
    %c0_i32 = arith.constant 0 : i32
    %c0_i32_0 = arith.constant 0 : i32
    %c0_i32_1 = arith.constant 0 : i32
    return %c0_i32, %c0_i32_0 : i32, i32
  }
  func.func @transform_2(%arg0: i32) -> (i32, i32) {
    %c0_i32 = arith.constant 0 : i32
    %c0_i32_0 = arith.constant 0 : i32
    %c0_i32_1 = arith.constant 0 : i32
    return %c0_i32, %c0_i32_0 : i32, i32
  }
  func.func @transform_3(%arg0: i32) -> (i32, i32) {
    %c0_i32 = arith.constant 0 : i32
    %c0_i32_0 = arith.constant 0 : i32
    %c0_i32_1 = arith.constant 0 : i32
    return %c0_i32, %c0_i32_0 : i32, i32
  }
  func.func @transform_4(%arg0: i32) -> (i32, i32) {
    %c0_i32 = arith.constant 0 : i32
    %c0_i32_0 = arith.constant 0 : i32
    %c0_i32_1 = arith.constant 0 : i32
    return %c0_i32, %c0_i32_0 : i32, i32
  }
  func.func @transform_5(%arg0: i32) -> (i32, i32) {
    %c0_i32 = arith.constant 0 : i32
    %c0_i32_0 = arith.constant 0 : i32
    %c0_i32_1 = arith.constant 0 : i32
    return %c0_i32, %c0_i32_0 : i32, i32
  }
  func.func @transform_6(%arg0: i32) -> (i32, i32) {
    %c0_i32 = arith.constant 0 : i32
    %c0_i32_0 = arith.constant 0 : i32
    %c0_i32_1 = arith.constant 0 : i32
    return %c0_i32, %c0_i32_0 : i32, i32
  }
  func.func @transform_7(%arg0: i32) -> (i32, i32) {
    %c0_i32 = arith.constant 0 : i32
    %c0_i32_0 = arith.constant 0 : i32
    return %arg0, %c0_i32 : i32, i32
  }
}

</mosaic_0001>

<llo_original>
// kernel: tpu_custom_call.1
$region0: #{tpu_custom_call.1}
  #allocation0 [shape = 'u32[]', space=smem, size = 0x4, offset = 0x4, fixed_abs, tag = 'smem constant byte address 0x4 - core index']
  #allocation1 [shape = 'u32[72,128]{1,0:T(1,128)}', space=vmem, size = 0x9000, scoped, tag = 'internal scratch']
  %s0 = inlined_call_operand.vmem [shape: bf16[512,32], index: 0, kind: input, shape index: {}]
  %s1 = inlined_call_operand.vmem [shape: bf16[32,128], index: 1, kind: input, shape index: {}]
  %s2 = inlined_call_operand.vmem [shape: bf16[128,128], index: 2, kind: input, shape index: {}]
  %s3 = inlined_call_operand.vmem [shape: bf16[128,128], index: 3, kind: input, shape index: {}]
  %s4 = inlined_call_operand.vmem [shape: f32[3,128], index: 4, kind: input, shape index: {}]
  %s5 = inlined_call_operand.hbm [shape: bf16[128,1024], index: 5, kind: input, shape index: {}]
  %s6 = inlined_call_operand.vmem [shape: f32[1,1024], index: 6, kind: input, shape index: {}]
  %s7 = inlined_call_operand.hbm [shape: bf16[512,1024], index: 7, kind: output, shape index: {}]
  %s8 = sld [smem:[#allocation0]]
  $region65: #{tpu_custom_call.1} parent=0
    _
  %s10 = ssub.s32 1, %s8
  %s11 = scalar_select 0, %s10, %s8
  $region1: #{tpu_custom_call.1} parent=0
    #allocation2 [shape = 'u8[262144]{0}', space=vmem, size = 0x40000, scoped, tag = 'input window, operand 5, single buffered']
    #allocation3 [shape = 's32[2]{0}', space=sflag, size = 0x8, scoped, tag = 'scoped memory for tpu_custom_call.1']
    #allocation4 [shape = 's32[2]{0}', space=sflag, size = 0x8, scoped, tag = 'scoped memory for tpu_custom_call.1']
    #allocation5 [shape = 'u8[1048576]{0}', space=vmem, size = 0x100000, scoped, tag = 'output window, operand 0']
    %12 = vsyncpa [#allocation3], 0
    %13 = vsyncpa [#allocation4], 0
    %s14 = scalar_lea.sflag [#allocation4], 1
    %15 = vsyncpa %s14, 0
    loop: start=0, step=1, limit=4
    $region2: #{tpu_custom_call.1} parent=1 // loop_pre_header
      _
    $region3: #{tpu_custom_call.1} parent=1 // loop_header
      %s17 = sphi 0, %s21
      %p18 = scmp.ge.s32.totalorder %s17, 4
      %s27 = sphi 0, %s29
      %s30 = sphi 0, %s27
      %s31 = sphi 0, %s30
      %s47 = sphi 0, %s31
      %s51 = sphi 0, %s51
      %s53 = sphi 0, %s51
      %s54 = sphi 0, %s53
      %s68 = sphi 0, %s54
      %s72 = sphi 0, %s72
      %s74 = sphi 0, %s72
      %s75 = sphi 0, %s74
      %s89 = sphi 0, %s75
      %s93 = sphi 0, %s93
      %s95 = sphi 0, %s93
      %s96 = sphi 0, %s95
      %s110 = sphi 0, %s96
      %s114 = sphi 0, %s114
      %s116 = sphi 0, %s114
      %s117 = sphi 0, %s116
      %s131 = sphi 0, %s117
      %s135 = sphi 0, %s135
      %s137 = sphi 0, %s135
      %s138 = sphi 0, %s137
      %s152 = sphi 0, %s138
      %s156 = sphi 0, %s156
      %s158 = sphi 0, %s156
      %s159 = sphi 0, %s158
      %s173 = sphi 0, %s159
      %s179 = sphi 0, %s181
      %s182 = sphi 0, %s179
      %s183 = sphi 0, %s182
      %s199 = sphi 0, %s183
    $region4: #{tpu_custom_call.1} parent=1 // loop_header_branch
      %20 = sbr.rel (%p18) target = $region8
    $region5: #{tpu_custom_call.1} parent=1 // loop_body
      %s22 = ssub.s32 %s17, 1
      %s23 = ssub.s32 %s17, 2
      %s24 = sadd.s32 %s17, 1
      %s25 = ssub.s32 %s17, %s24
      %p26 = scmp.eq.s32.totalorder %s25, 0
      %s28 = sadd.s32 %s27, 1
      %s29 = scalar_select %p26, %s27, %s28
      %p32 = pneg %p26
      %p33 = scmp.eq.s32.totalorder %s17, 1
      %p34 = por %p32, %p33
      %p35 = scmp.ne.s32.totalorder %s27, %s30
      %p36 = scmp.eq.s32.totalorder %s17, 0
      %p37 = por %p35, %p36
      %p38 = scmp.ne.s32.totalorder %s27, %s30
      %p39 = scmp.eq.s32.totalorder %s22, 1
      %p40 = por %p38, %p39
      %p41 = scmp.ne.s32.totalorder %s30, %s31
      %p42 = scmp.eq.s32.totalorder %s22, 0
      %p43 = por %p41, %p42
      %p44 = scmp.ne.s32.totalorder %s30, %s31
      %p45 = scmp.eq.s32.totalorder %s23, 1
      %p46 = por %p44, %p45
      %p48 = scmp.ne.s32.totalorder %s31, %s47
      %p49 = scmp.eq.s32.totalorder %s23, 0
      %p50 = por %p48, %p49
      %s52 = sadd.s32 %s51, 1
      %p55 = scmp.eq.s32.totalorder %s17, 1
      %p56 = scmp.ne.s32.totalorder %s51, %s53
      %p57 = scmp.eq.s32.totalorder %s17, 0
      %p58 = por %p56, %p57
      %p59 = scmp.ne.s32.totalorder %s51, %s53
      %p60 = scmp.eq.s32.totalorder %s22, 1
      %p61 = por %p59, %p60
      %p62 = scmp.ne.s32.totalorder %s53, %s54
      %p63 = scmp.eq.s32.totalorder %s22, 0
      %p64 = por %p62, %p63
      %p65 = scmp.ne.s32.totalorder %s53, %s54
      %p66 = scmp.eq.s32.totalorder %s23, 1
      %p67 = por %p65, %p66
      %p69 = scmp.ne.s32.totalorder %s54, %s68
      %p70 = scmp.eq.s32.totalorder %s23, 0
      %p71 = por %p69, %p70
      %s73 = sadd.s32 %s72, 1
      %p76 = scmp.eq.s32.totalorder %s17, 1
      %p77 = scmp.ne.s32.totalorder %s72, %s74
      %p78 = scmp.eq.s32.totalorder %s17, 0
      %p79 = por %p77, %p78
      %p80 = scmp.ne.s32.totalorder %s72, %s74
      %p81 = scmp.eq.s32.totalorder %s22, 1
      %p82 = por %p80, %p81
      %p83 = scmp.ne.s32.totalorder %s74, %s75
      %p84 = scmp.eq.s32.totalorder %s22, 0
      %p85 = por %p83, %p84
      %p86 = scmp.ne.s32.totalorder %s74, %s75
      %p87 = scmp.eq.s32.totalorder %s23, 1
      %p88 = por %p86, %p87
      %p90 = scmp.ne.s32.totalorder %s75, %s89
      %p91 = scmp.eq.s32.totalorder %s23, 0
      %p92 = por %p90, %p91
      %s94 = sadd.s32 %s93, 1
      %p97 = scmp.eq.s32.totalorder %s17, 1
      %p98 = scmp.ne.s32.totalorder %s93, %s95
      %p99 = scmp.eq.s32.totalorder %s17, 0
      %p100 = por %p98, %p99
      %p101 = scmp.ne.s32.totalorder %s93, %s95
      %p102 = scmp.eq.s32.totalorder %s22, 1
      %p103 = por %p101, %p102
      %p104 = scmp.ne.s32.totalorder %s95, %s96
      %p105 = scmp.eq.s32.totalorder %s22, 0
      %p106 = por %p104, %p105
      %p107 = scmp.ne.s32.totalorder %s95, %s96
      %p108 = scmp.eq.s32.totalorder %s23, 1
      %p109 = por %p107, %p108
      %p111 = scmp.ne.s32.totalorder %s96, %s110
      %p112 = scmp.eq.s32.totalorder %s23, 0
      %p113 = por %p111, %p112
      %s115 = sadd.s32 %s114, 1
      %p118 = scmp.eq.s32.totalorder %s17, 1
      %p119 = scmp.ne.s32.totalorder %s114, %s116
      %p120 = scmp.eq.s32.totalorder %s17, 0
      %p121 = por %p119, %p120
      %p122 = scmp.ne.s32.totalorder %s114, %s116
      %p123 = scmp.eq.s32.totalorder %s22, 1
      %p124 = por %p122, %p123
      %p125 = scmp.ne.s32.totalorder %s116, %s117
      %p126 = scmp.eq.s32.totalorder %s22, 0
      %p127 = por %p125, %p126
      %p128 = scmp.ne.s32.totalorder %s116, %s117
      %p129 = scmp.eq.s32.totalorder %s23, 1
      %p130 = por %p128, %p129
      %p132 = scmp.ne.s32.totalorder %s117, %s131
      %p133 = scmp.eq.s32.totalorder %s23, 0
      %p134 = por %p132, %p133
      %s136 = sadd.s32 %s135, 1
      %p139 = scmp.eq.s32.totalorder %s17, 1
      %p140 = scmp.ne.s32.totalorder %s135, %s137
      %p141 = scmp.eq.s32.totalorder %s17, 0
      %p142 = por %p140, %p141
      %p143 = scmp.ne.s32.totalorder %s135, %s137
      %p144 = scmp.eq.s32.totalorder %s22, 1
      %p145 = por %p143, %p144
      %p146 = scmp.ne.s32.totalorder %s137, %s138
      %p147 = scmp.eq.s32.totalorder %s22, 0
      %p148 = por %p146, %p147
      %p149 = scmp.ne.s32.totalorder %s137, %s138
      %p150 = scmp.eq.s32.totalorder %s23, 1
      %p151 = por %p149, %p150
      %p153 = scmp.ne.s32.totalorder %s138, %s152
      %p154 = scmp.eq.s32.totalorder %s23, 0
      %p155 = por %p153, %p154
      %s157 = sadd.s32 %s156, 1
      %p160 = scmp.eq.s32.totalorder %s17, 1
      %p161 = scmp.ne.s32.totalorder %s156, %s158
      %p162 = scmp.eq.s32.totalorder %s17, 0
      %p163 = por %p161, %p162
      %p164 = scmp.ne.s32.totalorder %s156, %s158
      %p165 = scmp.eq.s32.totalorder %s22, 1
      %p166 = por %p164, %p165
      %p167 = scmp.ne.s32.totalorder %s158, %s159
      %p168 = scmp.eq.s32.totalorder %s22, 0
      %p169 = por %p167, %p168
      %p170 = scmp.ne.s32.totalorder %s158, %s159
      %p171 = scmp.eq.s32.totalorder %s23, 1
      %p172 = por %p170, %p171
      %p174 = scmp.ne.s32.totalorder %s159, %s173
      %p175 = scmp.eq.s32.totalorder %s23, 0
      %p176 = por %p174, %p175
      %s177 = ssub.s32 %s17, %s24
      %p178 = scmp.eq.s32.totalorder %s177, 0
      %s180 = sadd.s32 %s179, 1
      %s181 = scalar_select %p178, %s179, %s180
      %p184 = pneg %p178
      %p185 = scmp.eq.s32.totalorder %s17, 1
      %p186 = por %p184, %p185
      %p187 = scmp.ne.s32.totalorder %s179, %s182
      %p188 = scmp.eq.s32.totalorder %s17, 0
      %p189 = por %p187, %p188
      %p190 = scmp.ne.s32.totalorder %s179, %s182
      %p191 = scmp.eq.s32.totalorder %s22, 1
      %p192 = por %p190, %p191
      %p193 = scmp.ne.s32.totalorder %s182, %s183
      %p194 = scmp.eq.s32.totalorder %s22, 0
      %p195 = por %p193, %p194
      %p196 = scmp.ne.s32.totalorder %s182, %s183
      %p197 = scmp.eq.s32.totalorder %s23, 1
      %p198 = por %p196, %p197
      %p200 = scmp.ne.s32.totalorder %s183, %s199
      %p201 = scmp.eq.s32.totalorder %s23, 0
      %p202 = por %p200, %p201
      %p203 = scmp.le.s32.totalorder 1, %s17
      %p204 = scmp.lt.s32.totalorder %s17, 3
      %p205 = pnand %p203, %p204
      %p206 = pneg %p205
      // Predicated region
      $region9: #{tpu_custom_call.1} parent=5 // pred_check
        _
      $region10: #{tpu_custom_call.1} parent=5 // pred_check_branch
        %208 = sbr.rel (%p205) target = $region12
      $region11: #{tpu_custom_call.1} parent=5 // pred_region
        %s209 = ssub.s32 %s17, 1
        // Predicated region
        $region13: #{tpu_custom_call.1} parent=11 // pred_check
          %p210 = pneg %p64
        $region14: #{tpu_custom_call.1} parent=11 // pred_check_branch
          %212 = sbr.rel (%p210) target = $region16
        $region15: #{tpu_custom_call.1} parent=11 // pred_region
          _
        $region16: #{tpu_custom_call.1} parent=11 // pred_fallthru
          _
        // Predicated region
        $region17: #{tpu_custom_call.1} parent=11 // pred_check
          %p213 = pneg %p85
        $region18: #{tpu_custom_call.1} parent=11 // pred_check_branch
          %215 = sbr.rel (%p213) target = $region20
        $region19: #{tpu_custom_call.1} parent=11 // pred_region
          _
        $region20: #{tpu_custom_call.1} parent=11 // pred_fallthru
          _
        // Predicated region
        $region21: #{tpu_custom_call.1} parent=11 // pred_check
          %p216 = pneg %p106
        $region22: #{tpu_custom_call.1} parent=11 // pred_check_branch
          %218 = sbr.rel (%p216) target = $region24
        $region23: #{tpu_custom_call.1} parent=11 // pred_region
          _
        $region24: #{tpu_custom_call.1} parent=11 // pred_fallthru
          _
        // Predicated region
        $region25: #{tpu_custom_call.1} parent=11 // pred_check
          %p219 = pneg %p127
        $region26: #{tpu_custom_call.1} parent=11 // pred_check_branch
          %221 = sbr.rel (%p219) target = $region28
        $region27: #{tpu_custom_call.1} parent=11 // pred_region
          _
        $region28: #{tpu_custom_call.1} parent=11 // pred_fallthru
          _
        // Predicated region
        $region29: #{tpu_custom_call.1} parent=11 // pred_check
          %p222 = pneg %p148
        $region30: #{tpu_custom_call.1} parent=11 // pred_check_branch
          %224 = sbr.rel (%p222) target = $region32
        $region31: #{tpu_custom_call.1} parent=11 // pred_region
          %226 = vsyncadd [#allocation3], 0
          %s227 = sshll.u32 %s5, 4
          %s228 = int_to_ptr.hbm [resolvable:$true] %s227
          %s229 = sshll.u32 [#allocation2], 4
          %s230 = int_to_ptr.vmem [resolvable:$true] %s229
          %235 = dma.hbm_to_vmem [thread:$0]  %s228, 8192, %s230, [#allocation3], 512, 512, 32
        $region32: #{tpu_custom_call.1} parent=11 // pred_fallthru
          _
        // Predicated region
        $region33: #{tpu_custom_call.1} parent=11 // pred_check
          %p236 = pneg %p169
        $region34: #{tpu_custom_call.1} parent=11 // pred_check_branch
          %238 = sbr.rel (%p236) target = $region36
        $region35: #{tpu_custom_call.1} parent=11 // pred_region
          _
        $region36: #{tpu_custom_call.1} parent=11 // pred_fallthru
          _
      $region12: #{tpu_custom_call.1} parent=5 // pred_fallthru
        _
      %p239 = scmp.lt.s32.totalorder %s17, 2
      // Predicated region
      $region37: #{tpu_custom_call.1} parent=5 // pred_check
        %p240 = pneg %p239
      $region38: #{tpu_custom_call.1} parent=5 // pred_check_branch
        %242 = sbr.rel (%p240) target = $region40
      $region39: #{tpu_custom_call.1} parent=5 // pred_region
        // Predicated region
        $region41: #{tpu_custom_call.1} parent=39 // pred_check
          %p243 = pneg %p37
        $region42: #{tpu_custom_call.1} parent=39 // pred_check_branch
          %245 = sbr.rel (%p243) target = $region44
        $region43: #{tpu_custom_call.1} parent=39 // pred_region
          %s246 = smul.u32 32, %s17
          %p247 = scmp.lt.s32.totalorder %s246, 63
          %s248 = scalar_select %p247, %s246, 63
          %s249 = smul.addr %s248, 4
          %s250 = scalar_lea.vmem %s0, %s249
          %s251 = smul.u32 32, %s17
        $region44: #{tpu_custom_call.1} parent=39 // pred_fallthru
          _
      $region40: #{tpu_custom_call.1} parent=5 // pred_fallthru
        _
      %p252 = scmp.le.s32.totalorder 1, %s17
      %p253 = scmp.lt.s32.totalorder %s17, 3
      %p254 = pnand %p252, %p253
      %p255 = pneg %p254
      // Predicated region
      $region45: #{tpu_custom_call.1} parent=5 // pred_check
        _
      $region46: #{tpu_custom_call.1} parent=5 // pred_check_branch
        %257 = sbr.rel (%p254) target = $region48
      $region47: #{tpu_custom_call.1} parent=5 // pred_region
        %s258 = ssub.s32 %s17, 1
        // Predicated region
        $region49: #{tpu_custom_call.1} parent=47 // pred_check
          %p259 = pneg %p148
        $region50: #{tpu_custom_call.1} parent=47 // pred_check_branch
          %261 = sbr.rel (%p259) target = $region52
        $region51: #{tpu_custom_call.1} parent=47 // pred_region
          %263 = dma.done [#allocation3], 8192
        $region52: #{tpu_custom_call.1} parent=47 // pred_fallthru
          _
        %s264 = smul.u32 32, %s22
        %p265 = scmp.lt.s32.totalorder %s264, 63
        %s266 = scalar_select %p265, %s264, 63
        %s267 = smul.addr %s266, 4
        %s268 = scalar_lea.vmem %s0, %s267
        %p269 = pneg %p43
        %p270 = pneg %p40
        %p271 = pneg %p64
        %p272 = pneg %p61
        %p273 = pneg %p85
        %p274 = pneg %p82
        %p275 = pneg %p106
        %p276 = pneg %p103
        %p277 = pneg %p127
        %p278 = pneg %p124
        %p279 = pneg %p148
        %p280 = pneg %p145
        %p281 = pneg %p169
        %p282 = pneg %p166
        %p283 = pneg %p195
        %p284 = pneg %p192
        %s285 = sand.u32 %s182, 1
        %s286 = scalar_lea.sflag [#allocation4], %s285
        %s287 = sand.u32 %s182, 1
        %s288 = smul.addr %s287, 1024
        %s289 = scalar_lea.vmem [#allocation5], %s288
        %s290 = smul.u32 32, %s22
        %p291 = scmp.lt.s32.totalorder %s290, 63
        %s292 = scalar_select %p291, %s290, 63
        %s293 = smul.addr %s292, 4
        %s294 = scalar_lea.vmem %s0, %s293
        %s295 = smul.u32 32, %s22
        %s296 = smul.u32 32, %s22
        %v298 = vld [vmem:[%s294] sm:$0xf]
        %v299 = vld [vmem:[%s294 + $0x4] sm:$0xf]
        %v300 = vld [vmem:[%s294 + $0x8] sm:$0xf]
        %v301 = vld [vmem:[%s294 + $0xc] sm:$0xf]
        %v302 = vld [vmem:[%s294 + $0x10] sm:$0xf]
        %v303 = vld [vmem:[%s294 + $0x14] sm:$0xf]
        %v304 = vld [vmem:[%s294 + $0x18] sm:$0xf]
        %v305 = vld [vmem:[%s294 + $0x1c] sm:$0xf]
        %v306 = vld [vmem:[%s294 + $0x20] sm:$0xf]
        %v307 = vld [vmem:[%s294 + $0x24] sm:$0xf]
        %v308 = vld [vmem:[%s294 + $0x28] sm:$0xf]
        %v309 = vld [vmem:[%s294 + $0x2c] sm:$0xf]
        %v310 = vld [vmem:[%s294 + $0x30] sm:$0xf]
        %v311 = vld [vmem:[%s294 + $0x34] sm:$0xf]
        %v312 = vld [vmem:[%s294 + $0x38] sm:$0xf]
        %v313 = vld [vmem:[%s294 + $0x3c] sm:$0xf]
        %v314 = vld [vmem:[%s294 + $0x40] sm:$0xf]
        %v315 = vld [vmem:[%s294 + $0x44] sm:$0xf]
        %v316 = vld [vmem:[%s294 + $0x48] sm:$0xf]
        %v317 = vld [vmem:[%s294 + $0x4c] sm:$0xf]
        %v318 = vld [vmem:[%s294 + $0x50] sm:$0xf]
        %v319 = vld [vmem:[%s294 + $0x54] sm:$0xf]
        %v320 = vld [vmem:[%s294 + $0x58] sm:$0xf]
        %v321 = vld [vmem:[%s294 + $0x5c] sm:$0xf]
        %v322 = vld [vmem:[%s294 + $0x60] sm:$0xf]
        %v323 = vld [vmem:[%s294 + $0x64] sm:$0xf]
        %v324 = vld [vmem:[%s294 + $0x68] sm:$0xf]
        %v325 = vld [vmem:[%s294 + $0x6c] sm:$0xf]
        %v326 = vld [vmem:[%s294 + $0x70] sm:$0xf]
        %v327 = vld [vmem:[%s294 + $0x74] sm:$0xf]
        %v328 = vld [vmem:[%s294 + $0x78] sm:$0xf]
        %v329 = vld [vmem:[%s294 + $0x7c] sm:$0xf]
        %v330 = vld [vmem:[%s4] sm:$0x7]
        %v331 = vld [vmem:[%s1] sm:$0xf]
        %v332 = vld [vmem:[%s1 + $0x4] sm:$0xf]
        %v333 = vld [vmem:[%s1 + $0x8] sm:$0xf]
        %v334 = vld [vmem:[%s1 + $0xc] sm:$0xf]
        %v335 = vperm.slane %v330, 0
        %v368 = vunpack.c.l.b16 %v298
        %v369 = vunpack.c.l.b16 %v299
        %v370 = vunpack.c.l.b16 %v300
        %v371 = vunpack.c.l.b16 %v301
        %v372 = vunpack.c.l.b16 %v302
        %v373 = vunpack.c.l.b16 %v303
        %v374 = vunpack.c.l.b16 %v304
        %v375 = vunpack.c.l.b16 %v305
        %v376 = vunpack.c.l.b16 %v306
        %v377 = vunpack.c.l.b16 %v307
        %v378 = vunpack.c.l.b16 %v308
        %v379 = vunpack.c.l.b16 %v309
        %v380 = vunpack.c.l.b16 %v310
        %v381 = vunpack.c.l.b16 %v311
        %v382 = vunpack.c.l.b16 %v312
        %v383 = vunpack.c.l.b16 %v313
        %v384 = vunpack.c.l.b16 %v314
        %v385 = vunpack.c.l.b16 %v315
        %v386 = vunpack.c.l.b16 %v316
        %v387 = vunpack.c.l.b16 %v317
        %v388 = vunpack.c.l.b16 %v318
        %v389 = vunpack.c.l.b16 %v319
        %v390 = vunpack.c.l.b16 %v320
        %v391 = vunpack.c.l.b16 %v321
        %v392 = vunpack.c.l.b16 %v322
        %v393 = vunpack.c.l.b16 %v323
        %v394 = vunpack.c.l.b16 %v324
        %v395 = vunpack.c.l.b16 %v325
        %v396 = vunpack.c.l.b16 %v326
        %v397 = vunpack.c.l.b16 %v327
        %v398 = vunpack.c.l.b16 %v328
        %v399 = vunpack.c.l.b16 %v329
        %v400 = vpack.c.b16 %v369, %v368
        %v401 = vpack.c.b16 %v371, %v370
        %v402 = vpack.c.b16 %v373, %v372
        %v403 = vpack.c.b16 %v375, %v374
        %v404 = vpack.c.b16 %v377, %v376
        %v405 = vpack.c.b16 %v379, %v378
        %v406 = vpack.c.b16 %v381, %v380
        %v407 = vpack.c.b16 %v383, %v382
        %v408 = vpack.c.b16 %v385, %v384
        %v409 = vpack.c.b16 %v387, %v386
        %v410 = vpack.c.b16 %v389, %v388
        %v411 = vpack.c.b16 %v391, %v390
        %v412 = vpack.c.b16 %v393, %v392
        %v413 = vpack.c.b16 %v395, %v394
        %v414 = vpack.c.b16 %v397, %v396
        %v415 = vpack.c.b16 %v399, %v398
        %v420 = vunpack.c.l.b16 %v331
        %v421 = vunpack.c.l.b16 %v332
        %v422 = vunpack.c.l.b16 %v333
        %v423 = vunpack.c.l.b16 %v334
        %v424 = vpack.c.b16 %v421, %v420
        %v425 = vpack.c.b16 %v423, %v422
        %vm428 = vcmask 261120
        %v430 = vsel %vm428, %v400, 0
        %v433 = vsel %vm428, %v401, 0
        %v436 = vsel %vm428, %v402, 0
        %v439 = vsel %vm428, %v403, 0
        %v442 = vsel %vm428, %v404, 0
        %v445 = vsel %vm428, %v405, 0
        %v448 = vsel %vm428, %v406, 0
        %v451 = vsel %vm428, %v407, 0
        %v454 = vsel %vm428, %v408, 0
        %v457 = vsel %vm428, %v409, 0
        %v460 = vsel %vm428, %v410, 0
        %v463 = vsel %vm428, %v411, 0
        %v466 = vsel %vm428, %v412, 0
        %v469 = vsel %vm428, %v413, 0
        %v472 = vsel %vm428, %v414, 0
        %v475 = vsel %vm428, %v415, 0
        %477 = vmatpush.bf16.msra.mxu0 0
        %478 = vmatpush.bf16.msra.mxu0 0
        %479 = vmatpush.bf16.msra.mxu0 0
        %480 = vmatpush.bf16.msra.mxu0 0
        %481 = vmatpush.bf16.msra.mxu0 0
        %482 = vmatpush.bf16.msra.mxu0 0
        %483 = vmatpush.bf16.msra.mxu0 %v425
        %484 = vmatpush.bf16.msra.mxu0 %v424
        %485 = vmatmul.bf16.gmra.mxu0 %v430
        %v486 = vpop.f32.mrf.mxu0
        %v487 = vadd.f32 %v335, %v486
        %v488 = vpop.f32.mrf.mxu0
        %v489 = vadd.f32 %v335, %v488
        %490 = vmatmul.bf16.gmra.mxu0 %v433
        %v491 = vpop.f32.mrf.mxu0
        %v492 = vadd.f32 %v335, %v491
        %v493 = vpop.f32.mrf.mxu0
        %v494 = vadd.f32 %v335, %v493
        %495 = vmatmul.bf16.gmra.mxu0 %v436
        %v496 = vpop.f32.mrf.mxu0
        %v497 = vadd.f32 %v335, %v496
        %v498 = vpop.f32.mrf.mxu0
        %v499 = vadd.f32 %v335, %v498
        %500 = vmatmul.bf16.gmra.mxu0 %v439
        %v501 = vpop.f32.mrf.mxu0
        %v502 = vadd.f32 %v335, %v501
        %v503 = vpop.f32.mrf.mxu0
        %v504 = vadd.f32 %v335, %v503
        %505 = vmatmul.bf16.gmra.mxu0 %v442
        %v506 = vpop.f32.mrf.mxu0
        %v507 = vadd.f32 %v335, %v506
        %v508 = vpop.f32.mrf.mxu0
        %v509 = vadd.f32 %v335, %v508
        %510 = vmatmul.bf16.gmra.mxu0 %v445
        %v511 = vpop.f32.mrf.mxu0
        %v512 = vadd.f32 %v335, %v511
        %v513 = vpop.f32.mrf.mxu0
        %v514 = vadd.f32 %v335, %v513
        %515 = vmatmul.bf16.gmra.mxu0 %v448
        %v516 = vpop.f32.mrf.mxu0
        %v517 = vadd.f32 %v335, %v516
        %v518 = vpop.f32.mrf.mxu0
        %v519 = vadd.f32 %v335, %v518
        %520 = vmatmul.bf16.gmra.mxu0 %v451
        %v521 = vpop.f32.mrf.mxu0
        %v522 = vadd.f32 %v335, %v521
        %v523 = vpop.f32.mrf.mxu0
        %v524 = vadd.f32 %v335, %v523
        %525 = vmatmul.bf16.gmra.mxu0 %v454
        %v526 = vpop.f32.mrf.mxu0
        %v527 = vadd.f32 %v335, %v526
        %v528 = vpop.f32.mrf.mxu0
        %v529 = vadd.f32 %v335, %v528
        %530 = vmatmul.bf16.gmra.mxu0 %v457
        %v531 = vpop.f32.mrf.mxu0
        %v532 = vadd.f32 %v335, %v531
        %v533 = vpop.f32.mrf.mxu0
        %v534 = vadd.f32 %v335, %v533
        %535 = vmatmul.bf16.gmra.mxu0 %v460
        %v536 = vpop.f32.mrf.mxu0
        %v537 = vadd.f32 %v335, %v536
        %v538 = vpop.f32.mrf.mxu0
        %v539 = vadd.f32 %v335, %v538
        %540 = vmatmul.bf16.gmra.mxu0 %v463
        %v541 = vpop.f32.mrf.mxu0
        %v542 = vadd.f32 %v335, %v541
        %v543 = vpop.f32.mrf.mxu0
        %v544 = vadd.f32 %v335, %v543
        %545 = vmatmul.bf16.gmra.mxu0 %v466
        %v546 = vpop.f32.mrf.mxu0
        %v547 = vadd.f32 %v335, %v546
        %v548 = vpop.f32.mrf.mxu0
        %v549 = vadd.f32 %v335, %v548
        %550 = vmatmul.bf16.gmra.mxu0 %v469
        %v551 = vpop.f32.mrf.mxu0
        %v552 = vadd.f32 %v335, %v551
        %v553 = vpop.f32.mrf.mxu0
        %v554 = vadd.f32 %v335, %v553
        %555 = vmatmul.bf16.gmra.mxu0 %v472
        %v556 = vpop.f32.mrf.mxu0
        %v557 = vadd.f32 %v335, %v556
        %v558 = vpop.f32.mrf.mxu0
        %v559 = vadd.f32 %v335, %v558
        %560 = vmatmul.bf16.gmra.mxu0 %v475
        %v561 = vpop.f32.mrf.mxu0
        %v562 = vadd.f32 %v335, %v561
        %v563 = vpop.f32.mrf.mxu0
        %v564 = vadd.f32 %v335, %v563
        %565 = vdwg.mxu0
        %v566 = vmax.f32 %v487, 0.0
        %v567 = vmax.f32 %v489, 0.0
        %v568 = vmax.f32 %v492, 0.0
        %v569 = vmax.f32 %v494, 0.0
        %v570 = vmax.f32 %v497, 0.0
        %v571 = vmax.f32 %v499, 0.0
        %v572 = vmax.f32 %v502, 0.0
        %v573 = vmax.f32 %v504, 0.0
        %v574 = vmax.f32 %v507, 0.0
        %v575 = vmax.f32 %v509, 0.0
        %v576 = vmax.f32 %v512, 0.0
        %v577 = vmax.f32 %v514, 0.0
        %v578 = vmax.f32 %v517, 0.0
        %v579 = vmax.f32 %v519, 0.0
        %v580 = vmax.f32 %v522, 0.0
        %v581 = vmax.f32 %v524, 0.0
        %v582 = vmax.f32 %v527, 0.0
        %v583 = vmax.f32 %v529, 0.0
        %v584 = vmax.f32 %v532, 0.0
        %v585 = vmax.f32 %v534, 0.0
        %v586 = vmax.f32 %v537, 0.0
        %v587 = vmax.f32 %v539, 0.0
        %v588 = vmax.f32 %v542, 0.0
        %v589 = vmax.f32 %v544, 0.0
        %v590 = vmax.f32 %v547, 0.0
        %v591 = vmax.f32 %v549, 0.0
        %v592 = vmax.f32 %v552, 0.0
        %v593 = vmax.f32 %v554, 0.0
        %v594 = vmax.f32 %v557, 0.0
        %v595 = vmax.f32 %v559, 0.0
        %v596 = vmax.f32 %v562, 0.0
        %v597 = vmax.f32 %v564, 0.0
        %v598 = vpack.c.bf16 %v567, %v566
        %v599 = vpack.c.bf16 %v569, %v568
        %v600 = vpack.c.bf16 %v571, %v570
        %v601 = vpack.c.bf16 %v573, %v572
        %v602 = vpack.c.bf16 %v575, %v574
        %v603 = vpack.c.bf16 %v577, %v576
        %v604 = vpack.c.bf16 %v579, %v578
        %v605 = vpack.c.bf16 %v581, %v580
        %v606 = vpack.c.bf16 %v583, %v582
        %v607 = vpack.c.bf16 %v585, %v584
        %v608 = vpack.c.bf16 %v587, %v586
        %v609 = vpack.c.bf16 %v589, %v588
        %v610 = vpack.c.bf16 %v591, %v590
        %v611 = vpack.c.bf16 %v593, %v592
        %v612 = vpack.c.bf16 %v595, %v594
        %v613 = vpack.c.bf16 %v597, %v596
        %v614 = vld [vmem:[%s2] sm:$0xf]
        %v615 = vld [vmem:[%s2 + $0x4] sm:$0xf]
        %v616 = vld [vmem:[%s2 + $0x8] sm:$0xf]
        %v617 = vld [vmem:[%s2 + $0xc] sm:$0xf]
        %v618 = vld [vmem:[%s2 + $0x10] sm:$0xf]
        %v619 = vld [vmem:[%s2 + $0x14] sm:$0xf]
        %v620 = vld [vmem:[%s2 + $0x18] sm:$0xf]
        %v621 = vld [vmem:[%s2 + $0x1c] sm:$0xf]
        %v622 = vld [vmem:[%s2 + $0x20] sm:$0xf]
        %v623 = vld [vmem:[%s2 + $0x24] sm:$0xf]
        %v624 = vld [vmem:[%s2 + $0x28] sm:$0xf]
        %v625 = vld [vmem:[%s2 + $0x2c] sm:$0xf]
        %v626 = vld [vmem:[%s2 + $0x30] sm:$0xf]
        %v627 = vld [vmem:[%s2 + $0x34] sm:$0xf]
        %v628 = vld [vmem:[%s2 + $0x38] sm:$0xf]
        %v629 = vld [vmem:[%s2 + $0x3c] sm:$0xf]
        %v630 = vperm.slane %v330, 1
        %v647 = vunpack.c.l.b16 %v614
        %v648 = vunpack.c.l.b16 %v615
        %v649 = vunpack.c.l.b16 %v616
        %v650 = vunpack.c.l.b16 %v617
        %v651 = vunpack.c.l.b16 %v618
        %v652 = vunpack.c.l.b16 %v619
        %v653 = vunpack.c.l.b16 %v620
        %v654 = vunpack.c.l.b16 %v621
        %v655 = vunpack.c.l.b16 %v622
        %v656 = vunpack.c.l.b16 %v623
        %v657 = vunpack.c.l.b16 %v624
        %v658 = vunpack.c.l.b16 %v625
        %v659 = vunpack.c.l.b16 %v626
        %v660 = vunpack.c.l.b16 %v627
        %v661 = vunpack.c.l.b16 %v628
        %v662 = vunpack.c.l.b16 %v629
        %v663 = vpack.c.b16 %v648, %v647
        %v664 = vpack.c.b16 %v650, %v649
        %v665 = vpack.c.b16 %v652, %v651
        %v666 = vpack.c.b16 %v654, %v653
        %v667 = vpack.c.b16 %v656, %v655
        %v668 = vpack.c.b16 %v658, %v657
        %v669 = vpack.c.b16 %v660, %v659
        %v670 = vpack.c.b16 %v662, %v661
        %679 = vmatpush.bf16.msra.mxu0 %v670
        %680 = vmatpush.bf16.msra.mxu0 %v669
        %681 = vmatpush.bf16.msra.mxu0 %v668
        %682 = vmatpush.bf16.msra.mxu0 %v667
        %683 = vmatpush.bf16.msra.mxu0 %v666
        %684 = vmatpush.bf16.msra.mxu0 %v665
        %685 = vmatpush.bf16.msra.mxu0 %v664
        %686 = vmatpush.bf16.msra.mxu0 %v663
        %687 = vmatmul.bf16.gmra.mxu0 %v598
        %v688 = vpop.f32.mrf.mxu0
        %v689 = vadd.f32 %v630, %v688
        %v690 = vpop.f32.mrf.mxu0
        %v691 = vadd.f32 %v630, %v690
        %692 = vmatmul.bf16.gmra.mxu0 %v599
        %v693 = vpop.f32.mrf.mxu0
        %v694 = vadd.f32 %v630, %v693
        %v695 = vpop.f32.mrf.mxu0
        %v696 = vadd.f32 %v630, %v695
        %697 = vmatmul.bf16.gmra.mxu0 %v600
        %v698 = vpop.f32.mrf.mxu0
        %v699 = vadd.f32 %v630, %v698
        %v700 = vpop.f32.mrf.mxu0
        %v701 = vadd.f32 %v630, %v700
        %702 = vmatmul.bf16.gmra.mxu0 %v601
        %v703 = vpop.f32.mrf.mxu0
        %v704 = vadd.f32 %v630, %v703
        %v705 = vpop.f32.mrf.mxu0
        %v706 = vadd.f32 %v630, %v705
        %707 = vmatmul.bf16.gmra.mxu0 %v602
        %v708 = vpop.f32.mrf.mxu0
        %v709 = vadd.f32 %v630, %v708
        %v710 = vpop.f32.mrf.mxu0
        %v711 = vadd.f32 %v630, %v710
        %712 = vmatmul.bf16.gmra.mxu0 %v603
        %v713 = vpop.f32.mrf.mxu0
        %v714 = vadd.f32 %v630, %v713
        %v715 = vpop.f32.mrf.mxu0
        %v716 = vadd.f32 %v630, %v715
        %717 = vmatmul.bf16.gmra.mxu0 %v604
        %v718 = vpop.f32.mrf.mxu0
        %v719 = vadd.f32 %v630, %v718
        %v720 = vpop.f32.mrf.mxu0
        %v721 = vadd.f32 %v630, %v720
        %722 = vmatmul.bf16.gmra.mxu0 %v605
        %v723 = vpop.f32.mrf.mxu0
        %v724 = vadd.f32 %v630, %v723
        %v725 = vpop.f32.mrf.mxu0
        %v726 = vadd.f32 %v630, %v725
        %727 = vmatmul.bf16.gmra.mxu0 %v606
        %v728 = vpop.f32.mrf.mxu0
        %v729 = vadd.f32 %v630, %v728
        %v730 = vpop.f32.mrf.mxu0
        %v731 = vadd.f32 %v630, %v730
        %732 = vmatmul.bf16.gmra.mxu0 %v607
        %v733 = vpop.f32.mrf.mxu0
        %v734 = vadd.f32 %v630, %v733
        %v735 = vpop.f32.mrf.mxu0
        %v736 = vadd.f32 %v630, %v735
        %737 = vmatmul.bf16.gmra.mxu0 %v608
        %v738 = vpop.f32.mrf.mxu0
        %v739 = vadd.f32 %v630, %v738
        %v740 = vpop.f32.mrf.mxu0
        %v741 = vadd.f32 %v630, %v740
        %742 = vmatmul.bf16.gmra.mxu0 %v609
        %v743 = vpop.f32.mrf.mxu0
        %v744 = vadd.f32 %v630, %v743
        %v745 = vpop.f32.mrf.mxu0
        %v746 = vadd.f32 %v630, %v745
        %747 = vmatmul.bf16.gmra.mxu0 %v610
        %v748 = vpop.f32.mrf.mxu0
        %v749 = vadd.f32 %v630, %v748
        %v750 = vpop.f32.mrf.mxu0
        %v751 = vadd.f32 %v630, %v750
        %752 = vmatmul.bf16.gmra.mxu0 %v611
        %v753 = vpop.f32.mrf.mxu0
        %v754 = vadd.f32 %v630, %v753
        %v755 = vpop.f32.mrf.mxu0
        %v756 = vadd.f32 %v630, %v755
        %757 = vmatmul.bf16.gmra.mxu0 %v612
        %v758 = vpop.f32.mrf.mxu0
        %v759 = vadd.f32 %v630, %v758
        %v760 = vpop.f32.mrf.mxu0
        %v761 = vadd.f32 %v630, %v760
        %762 = vmatmul.bf16.gmra.mxu0 %v613
        %v763 = vpop.f32.mrf.mxu0
        %v764 = vadd.f32 %v630, %v763
        %v765 = vpop.f32.mrf.mxu0
        %v766 = vadd.f32 %v630, %v765
        %767 = vdwg.mxu0
        %v768 = vmax.f32 %v689, 0.0
        %v769 = vmax.f32 %v691, 0.0
        %v770 = vmax.f32 %v694, 0.0
        %v771 = vmax.f32 %v696, 0.0
        %v772 = vmax.f32 %v699, 0.0
        %v773 = vmax.f32 %v701, 0.0
        %v774 = vmax.f32 %v704, 0.0
        %v775 = vmax.f32 %v706, 0.0
        %v776 = vmax.f32 %v709, 0.0
        %v777 = vmax.f32 %v711, 0.0
        %v778 = vmax.f32 %v714, 0.0
        %v779 = vmax.f32 %v716, 0.0
        %v780 = vmax.f32 %v719, 0.0
        %v781 = vmax.f32 %v721, 0.0
        %v782 = vmax.f32 %v724, 0.0
        %v783 = vmax.f32 %v726, 0.0
        %v784 = vmax.f32 %v729, 0.0
        %v785 = vmax.f32 %v731, 0.0
        %v786 = vmax.f32 %v734, 0.0
        %v787 = vmax.f32 %v736, 0.0
        %v788 = vmax.f32 %v739, 0.0
        %v789 = vmax.f32 %v741, 0.0
        %v790 = vmax.f32 %v744, 0.0
        %v791 = vmax.f32 %v746, 0.0
        %v792 = vmax.f32 %v749, 0.0
        %v793 = vmax.f32 %v751, 0.0
        %v794 = vmax.f32 %v754, 0.0
        %v795 = vmax.f32 %v756, 0.0
        %v796 = vmax.f32 %v759, 0.0
        %v797 = vmax.f32 %v761, 0.0
        %v798 = vmax.f32 %v764, 0.0
        %v799 = vmax.f32 %v766, 0.0
        %v800 = vpack.c.bf16 %v769, %v768
        %v801 = vpack.c.bf16 %v771, %v770
        %v802 = vpack.c.bf16 %v773, %v772
        %v803 = vpack.c.bf16 %v775, %v774
        %v804 = vpack.c.bf16 %v777, %v776
        %v805 = vpack.c.bf16 %v779, %v778
        %v806 = vpack.c.bf16 %v781, %v780
        %v807 = vpack.c.bf16 %v783, %v782
        %v808 = vpack.c.bf16 %v785, %v784
        %v809 = vpack.c.bf16 %v787, %v786
        %v810 = vpack.c.bf16 %v789, %v788
        %v811 = vpack.c.bf16 %v791, %v790
        %v812 = vpack.c.bf16 %v793, %v792
        %v813 = vpack.c.bf16 %v795, %v794
        %v814 = vpack.c.bf16 %v797, %v796
        %v815 = vpack.c.bf16 %v799, %v798
        %v816 = vld [vmem:[%s3] sm:$0xf]
        %v817 = vld [vmem:[%s3 + $0x4] sm:$0xf]
        %v818 = vld [vmem:[%s3 + $0x8] sm:$0xf]
        %v819 = vld [vmem:[%s3 + $0xc] sm:$0xf]
        %v820 = vld [vmem:[%s3 + $0x10] sm:$0xf]
        %v821 = vld [vmem:[%s3 + $0x14] sm:$0xf]
        %v822 = vld [vmem:[%s3 + $0x18] sm:$0xf]
        %v823 = vld [vmem:[%s3 + $0x1c] sm:$0xf]
        %v824 = vld [vmem:[%s3 + $0x20] sm:$0xf]
        %v825 = vld [vmem:[%s3 + $0x24] sm:$0xf]
        %v826 = vld [vmem:[%s3 + $0x28] sm:$0xf]
        %v827 = vld [vmem:[%s3 + $0x2c] sm:$0xf]
        %v828 = vld [vmem:[%s3 + $0x30] sm:$0xf]
        %v829 = vld [vmem:[%s3 + $0x34] sm:$0xf]
        %v830 = vld [vmem:[%s3 + $0x38] sm:$0xf]
        %v831 = vld [vmem:[%s3 + $0x3c] sm:$0xf]
        %v832 = vperm.slane %v330, 2
        %v849 = vunpack.c.l.b16 %v816
        %v850 = vunpack.c.l.b16 %v817
        %v851 = vunpack.c.l.b16 %v818
        %v852 = vunpack.c.l.b16 %v819
        %v853 = vunpack.c.l.b16 %v820
        %v854 = vunpack.c.l.b16 %v821
        %v855 = vunpack.c.l.b16 %v822
        %v856 = vunpack.c.l.b16 %v823
        %v857 = vunpack.c.l.b16 %v824
        %v858 = vunpack.c.l.b16 %v825
        %v859 = vunpack.c.l.b16 %v826
        %v860 = vunpack.c.l.b16 %v827
        %v861 = vunpack.c.l.b16 %v828
        %v862 = vunpack.c.l.b16 %v829
        %v863 = vunpack.c.l.b16 %v830
        %v864 = vunpack.c.l.b16 %v831
        %v865 = vpack.c.b16 %v850, %v849
        %v866 = vpack.c.b16 %v852, %v851
        %v867 = vpack.c.b16 %v854, %v853
        %v868 = vpack.c.b16 %v856, %v855
        %v869 = vpack.c.b16 %v858, %v857
        %v870 = vpack.c.b16 %v860, %v859
        %v871 = vpack.c.b16 %v862, %v861
        %v872 = vpack.c.b16 %v864, %v863
        %881 = vmatpush.bf16.msra.mxu0 %v872
        %882 = vmatpush.bf16.msra.mxu0 %v871
        %883 = vmatpush.bf16.msra.mxu0 %v870
        %884 = vmatpush.bf16.msra.mxu0 %v869
        %885 = vmatpush.bf16.msra.mxu0 %v868
        %886 = vmatpush.bf16.msra.mxu0 %v867
        %887 = vmatpush.bf16.msra.mxu0 %v866
        %888 = vmatpush.bf16.msra.mxu0 %v865
        %889 = vmatmul.bf16.gmra.mxu0 %v800
        %v890 = vpop.f32.mrf.mxu0
        %v891 = vadd.f32 %v832, %v890
        %v892 = vpop.f32.mrf.mxu0
        %v893 = vadd.f32 %v832, %v892
        %894 = vmatmul.bf16.gmra.mxu0 %v801
        %v895 = vpop.f32.mrf.mxu0
        %v896 = vadd.f32 %v832, %v895
        %v897 = vpop.f32.mrf.mxu0
        %v898 = vadd.f32 %v832, %v897
        %899 = vmatmul.bf16.gmra.mxu0 %v802
        %v900 = vpop.f32.mrf.mxu0
        %v901 = vadd.f32 %v832, %v900
        %v902 = vpop.f32.mrf.mxu0
        %v903 = vadd.f32 %v832, %v902
        %904 = vmatmul.bf16.gmra.mxu0 %v803
        %v905 = vpop.f32.mrf.mxu0
        %v906 = vadd.f32 %v832, %v905
        %v907 = vpop.f32.mrf.mxu0
        %v908 = vadd.f32 %v832, %v907
        %909 = vmatmul.bf16.gmra.mxu0 %v804
        %v910 = vpop.f32.mrf.mxu0
        %v911 = vadd.f32 %v832, %v910
        %v912 = vpop.f32.mrf.mxu0
        %v913 = vadd.f32 %v832, %v912
        %914 = vmatmul.bf16.gmra.mxu0 %v805
        %v915 = vpop.f32.mrf.mxu0
        %v916 = vadd.f32 %v832, %v915
        %v917 = vpop.f32.mrf.mxu0
        %v918 = vadd.f32 %v832, %v917
        %919 = vmatmul.bf16.gmra.mxu0 %v806
        %v920 = vpop.f32.mrf.mxu0
        %v921 = vadd.f32 %v832, %v920
        %v922 = vpop.f32.mrf.mxu0
        %v923 = vadd.f32 %v832, %v922
        %924 = vmatmul.bf16.gmra.mxu0 %v807
        %v925 = vpop.f32.mrf.mxu0
        %v926 = vadd.f32 %v832, %v925
        %v927 = vpop.f32.mrf.mxu0
        %v928 = vadd.f32 %v832, %v927
        %929 = vmatmul.bf16.gmra.mxu0 %v808
        %v930 = vpop.f32.mrf.mxu0
        %v931 = vadd.f32 %v832, %v930
        %v932 = vpop.f32.mrf.mxu0
        %v933 = vadd.f32 %v832, %v932
        %934 = vmatmul.bf16.gmra.mxu0 %v809
        %v935 = vpop.f32.mrf.mxu0
        %v936 = vadd.f32 %v832, %v935
        %v937 = vpop.f32.mrf.mxu0
        %v938 = vadd.f32 %v832, %v937
        %939 = vmatmul.bf16.gmra.mxu0 %v810
        %v940 = vpop.f32.mrf.mxu0
        %v941 = vadd.f32 %v832, %v940
        %v942 = vpop.f32.mrf.mxu0
        %v943 = vadd.f32 %v832, %v942
        %944 = vmatmul.bf16.gmra.mxu0 %v811
        %v945 = vpop.f32.mrf.mxu0
        %v946 = vadd.f32 %v832, %v945
        %v947 = vpop.f32.mrf.mxu0
        %v948 = vadd.f32 %v832, %v947
        %949 = vmatmul.bf16.gmra.mxu0 %v812
        %v950 = vpop.f32.mrf.mxu0
        %v951 = vadd.f32 %v832, %v950
        %v952 = vpop.f32.mrf.mxu0
        %v953 = vadd.f32 %v832, %v952
        %954 = vmatmul.bf16.gmra.mxu0 %v813
        %v955 = vpop.f32.mrf.mxu0
        %v956 = vadd.f32 %v832, %v955
        %v957 = vpop.f32.mrf.mxu0
        %v958 = vadd.f32 %v832, %v957
        %959 = vmatmul.bf16.gmra.mxu0 %v814
        %v960 = vpop.f32.mrf.mxu0
        %v961 = vadd.f32 %v832, %v960
        %v962 = vpop.f32.mrf.mxu0
        %v963 = vadd.f32 %v832, %v962
        %964 = vmatmul.bf16.gmra.mxu0 %v815
        %v965 = vpop.f32.mrf.mxu0
        %v966 = vadd.f32 %v832, %v965
        %v967 = vpop.f32.mrf.mxu0
        %v968 = vadd.f32 %v832, %v967
        %969 = vdwg.mxu0
        %v970 = vmax.f32 %v891, 0.0
        %v971 = vmax.f32 %v893, 0.0
        %v972 = vmax.f32 %v896, 0.0
        %v973 = vmax.f32 %v898, 0.0
        %v974 = vmax.f32 %v901, 0.0
        %v975 = vmax.f32 %v903, 0.0
        %v976 = vmax.f32 %v906, 0.0
        %v977 = vmax.f32 %v908, 0.0
        %v978 = vmax.f32 %v911, 0.0
        %v979 = vmax.f32 %v913, 0.0
        %v980 = vmax.f32 %v916, 0.0
        %v981 = vmax.f32 %v918, 0.0
        %v982 = vmax.f32 %v921, 0.0
        %v983 = vmax.f32 %v923, 0.0
        %v984 = vmax.f32 %v926, 0.0
        %v985 = vmax.f32 %v928, 0.0
        %v986 = vmax.f32 %v931, 0.0
        %v987 = vmax.f32 %v933, 0.0
        %v988 = vmax.f32 %v936, 0.0
        %v989 = vmax.f32 %v938, 0.0
        %v990 = vmax.f32 %v941, 0.0
        %v991 = vmax.f32 %v943, 0.0
        %v992 = vmax.f32 %v946, 0.0
        %v993 = vmax.f32 %v948, 0.0
        %v994 = vmax.f32 %v951, 0.0
        %v995 = vmax.f32 %v953, 0.0
        %v996 = vmax.f32 %v956, 0.0
        %v997 = vmax.f32 %v958, 0.0
        %v998 = vmax.f32 %v961, 0.0
        %v999 = vmax.f32 %v963, 0.0
        %v1000 = vmax.f32 %v966, 0.0
        %v1001 = vmax.f32 %v968, 0.0
        %v1002 = vpack.c.bf16 %v971, %v970
        %v1003 = vpack.c.bf16 %v973, %v972
        %v1004 = vpack.c.bf16 %v975, %v974
        %v1005 = vpack.c.bf16 %v977, %v976
        %v1006 = vpack.c.bf16 %v979, %v978
        %v1007 = vpack.c.bf16 %v981, %v980
        %v1008 = vpack.c.bf16 %v983, %v982
        %v1009 = vpack.c.bf16 %v985, %v984
        %v1010 = vpack.c.bf16 %v987, %v986
        %v1011 = vpack.c.bf16 %v989, %v988
        %v1012 = vpack.c.bf16 %v991, %v990
        %v1013 = vpack.c.bf16 %v993, %v992
        %v1014 = vpack.c.bf16 %v995, %v994
        %v1015 = vpack.c.bf16 %v997, %v996
        %v1016 = vpack.c.bf16 %v999, %v998
        %v1017 = vpack.c.bf16 %v1001, %v1000
        %v1018 = vld [vmem:[#allocation2] sm:$0xff]
        %v1019 = vld [vmem:[#allocation2 + $0x8] sm:$0xff]
        %v1020 = vld [vmem:[#allocation2 + $0x10] sm:$0xff]
        %v1021 = vld [vmem:[#allocation2 + $0x18] sm:$0xff]
        %v1022 = vld [vmem:[#allocation2 + $0x20] sm:$0xff]
        %v1023 = vld [vmem:[#allocation2 + $0x28] sm:$0xff]
        %v1024 = vld [vmem:[#allocation2 + $0x30] sm:$0xff]
        %v1025 = vld [vmem:[#allocation2 + $0x38] sm:$0xff]
        %v1026 = vld [vmem:[#allocation2 + $0x40] sm:$0xff]
        %v1027 = vld [vmem:[#allocation2 + $0x48] sm:$0xff]
        %v1028 = vld [vmem:[#allocation2 + $0x50] sm:$0xff]
        %v1029 = vld [vmem:[#allocation2 + $0x58] sm:$0xff]
        %v1030 = vld [vmem:[#allocation2 + $0x60] sm:$0xff]
        %v1031 = vld [vmem:[#allocation2 + $0x68] sm:$0xff]
        %v1032 = vld [vmem:[#allocation2 + $0x70] sm:$0xff]
        %v1033 = vld [vmem:[#allocation2 + $0x78] sm:$0xff]
        %v1034 = vld [vmem:[#allocation2 + $0x80] sm:$0xff]
        %v1035 = vld [vmem:[#allocation2 + $0x88] sm:$0xff]
        %v1036 = vld [vmem:[#allocation2 + $0x90] sm:$0xff]
        %v1037 = vld [vmem:[#allocation2 + $0x98] sm:$0xff]
        %v1038 = vld [vmem:[#allocation2 + $0xa0] sm:$0xff]
        %v1039 = vld [vmem:[#allocation2 + $0xa8] sm:$0xff]
        %v1040 = vld [vmem:[#allocation2 + $0xb0] sm:$0xff]
        %v1041 = vld [vmem:[#allocation2 + $0xb8] sm:$0xff]
        %v1042 = vld [vmem:[#allocation2 + $0xc0] sm:$0xff]
        %v1043 = vld [vmem:[#allocation2 + $0xc8] sm:$0xff]
        %v1044 = vld [vmem:[#allocation2 + $0xd0] sm:$0xff]
        %v1045 = vld [vmem:[#allocation2 + $0xd8] sm:$0xff]
        %v1046 = vld [vmem:[#allocation2 + $0xe0] sm:$0xff]
        %v1047 = vld [vmem:[#allocation2 + $0xe8] sm:$0xff]
        %v1048 = vld [vmem:[#allocation2 + $0xf0] sm:$0xff]
        %v1049 = vld [vmem:[#allocation2 + $0xf8] sm:$0xff]
        %v1050 = vld [vmem:[#allocation2 + $0x100] sm:$0xff]
        %v1051 = vld [vmem:[#allocation2 + $0x108] sm:$0xff]
        %v1052 = vld [vmem:[#allocation2 + $0x110] sm:$0xff]
        %v1053 = vld [vmem:[#allocation2 + $0x118] sm:$0xff]
        %v1054 = vld [vmem:[#allocation2 + $0x120] sm:$0xff]
        %v1055 = vld [vmem:[#allocation2 + $0x128] sm:$0xff]
        %v1056 = vld [vmem:[#allocation2 + $0x130] sm:$0xff]
        %v1057 = vld [vmem:[#allocation2 + $0x138] sm:$0xff]
        %v1058 = vld [vmem:[#allocation2 + $0x140] sm:$0xff]
        %v1059 = vld [vmem:[#allocation2 + $0x148] sm:$0xff]
        %v1060 = vld [vmem:[#allocation2 + $0x150] sm:$0xff]
        %v1061 = vld [vmem:[#allocation2 + $0x158] sm:$0xff]
        %v1062 = vld [vmem:[#allocation2 + $0x160] sm:$0xff]
        %v1063 = vld [vmem:[#allocation2 + $0x168] sm:$0xff]
        %v1064 = vld [vmem:[#allocation2 + $0x170] sm:$0xff]
        %v1065 = vld [vmem:[#allocation2 + $0x178] sm:$0xff]
        %v1066 = vld [vmem:[#allocation2 + $0x180] sm:$0xff]
        %v1067 = vld [vmem:[#allocation2 + $0x188] sm:$0xff]
        %v1068 = vld [vmem:[#allocation2 + $0x190] sm:$0xff]
        %v1069 = vld [vmem:[#allocation2 + $0x198] sm:$0xff]
        %v1070 = vld [vmem:[#allocation2 + $0x1a0] sm:$0xff]
        %v1071 = vld [vmem:[#allocation2 + $0x1a8] sm:$0xff]
        %v1072 = vld [vmem:[#allocation2 + $0x1b0] sm:$0xff]
        %v1073 = vld [vmem:[#allocation2 + $0x1b8] sm:$0xff]
        %v1074 = vld [vmem:[#allocation2 + $0x1c0] sm:$0xff]
        %v1075 = vld [vmem:[#allocation2 + $0x1c8] sm:$0xff]
        %v1076 = vld [vmem:[#allocation2 + $0x1d0] sm:$0xff]
        %v1077 = vld [vmem:[#allocation2 + $0x1d8] sm:$0xff]
        %v1078 = vld [vmem:[#allocation2 + $0x1e0] sm:$0xff]
        %v1079 = vld [vmem:[#allocation2 + $0x1e8] sm:$0xff]
        %v1080 = vld [vmem:[#allocation2 + $0x1f0] sm:$0xff]
        %v1081 = vld [vmem:[#allocation2 + $0x1f8] sm:$0xff]
        %v1082 = vld [vmem:[%s6] sm:$0xff]
        %v1084 = vperm.slane %v1082, 0
        %v1085 = vperm.slane %v1082, 1
        %v1086 = vperm.slane %v1082, 2
        %v1087 = vperm.slane %v1082, 3
        %v1088 = vperm.slane %v1082, 4
        %v1089 = vperm.slane %v1082, 5
        %v1090 = vperm.slane %v1082, 6
        %v1091 = vperm.slane %v1082, 7
        %v1164 = vunpack.c.l.b16 %v1018
        %v1165 = vunpack.c.h.b16 %v1018
        %v1166 = vunpack.c.l.b16 %v1019
        %v1167 = vunpack.c.h.b16 %v1019
        %v1168 = vunpack.c.l.b16 %v1020
        %v1169 = vunpack.c.h.b16 %v1020
        %v1170 = vunpack.c.l.b16 %v1021
        %v1171 = vunpack.c.h.b16 %v1021
        %v1172 = vunpack.c.l.b16 %v1022
        %v1173 = vunpack.c.h.b16 %v1022
        %v1174 = vunpack.c.l.b16 %v1023
        %v1175 = vunpack.c.h.b16 %v1023
        %v1176 = vunpack.c.l.b16 %v1024
        %v1177 = vunpack.c.h.b16 %v1024
        %v1178 = vunpack.c.l.b16 %v1025
        %v1179 = vunpack.c.h.b16 %v1025
        %v1180 = vunpack.c.l.b16 %v1026
        %v1181 = vunpack.c.h.b16 %v1026
        %v1182 = vunpack.c.l.b16 %v1027
        %v1183 = vunpack.c.h.b16 %v1027
        %v1184 = vunpack.c.l.b16 %v1028
        %v1185 = vunpack.c.h.b16 %v1028
        %v1186 = vunpack.c.l.b16 %v1029
        %v1187 = vunpack.c.h.b16 %v1029
        %v1188 = vunpack.c.l.b16 %v1030
        %v1189 = vunpack.c.h.b16 %v1030
        %v1190 = vunpack.c.l.b16 %v1031
        %v1191 = vunpack.c.h.b16 %v1031
        %v1192 = vunpack.c.l.b16 %v1032
        %v1193 = vunpack.c.h.b16 %v1032
        %v1194 = vunpack.c.l.b16 %v1033
        %v1195 = vunpack.c.h.b16 %v1033
        %v1196 = vunpack.c.l.b16 %v1034
        %v1197 = vunpack.c.h.b16 %v1034
        %v1198 = vunpack.c.l.b16 %v1035
        %v1199 = vunpack.c.h.b16 %v1035
        %v1200 = vunpack.c.l.b16 %v1036
        %v1201 = vunpack.c.h.b16 %v1036
        %v1202 = vunpack.c.l.b16 %v1037
        %v1203 = vunpack.c.h.b16 %v1037
        %v1204 = vunpack.c.l.b16 %v1038
        %v1205 = vunpack.c.h.b16 %v1038
        %v1206 = vunpack.c.l.b16 %v1039
        %v1207 = vunpack.c.h.b16 %v1039
        %v1208 = vunpack.c.l.b16 %v1040
        %v1209 = vunpack.c.h.b16 %v1040
        %v1210 = vunpack.c.l.b16 %v1041
        %v1211 = vunpack.c.h.b16 %v1041
        %v1212 = vunpack.c.l.b16 %v1042
        %v1213 = vunpack.c.h.b16 %v1042
        %v1214 = vunpack.c.l.b16 %v1043
        %v1215 = vunpack.c.h.b16 %v1043
        %v1216 = vunpack.c.l.b16 %v1044
        %v1217 = vunpack.c.h.b16 %v1044
        %v1218 = vunpack.c.l.b16 %v1045
        %v1219 = vunpack.c.h.b16 %v1045
        %v1220 = vunpack.c.l.b16 %v1046
        %v1221 = vunpack.c.h.b16 %v1046
        %v1222 = vunpack.c.l.b16 %v1047
        %v1223 = vunpack.c.h.b16 %v1047
        %v1224 = vunpack.c.l.b16 %v1048
        %v1225 = vunpack.c.h.b16 %v1048
        %v1226 = vunpack.c.l.b16 %v1049
        %v1227 = vunpack.c.h.b16 %v1049
        %v1228 = vunpack.c.l.b16 %v1050
        %v1229 = vunpack.c.h.b16 %v1050
        %v1230 = vunpack.c.l.b16 %v1051
        %v1231 = vunpack.c.h.b16 %v1051
        %v1232 = vunpack.c.l.b16 %v1052
        %v1233 = vunpack.c.h.b16 %v1052
        %v1234 = vunpack.c.l.b16 %v1053
        %v1235 = vunpack.c.h.b16 %v1053
        %v1236 = vunpack.c.l.b16 %v1054
        %v1237 = vunpack.c.h.b16 %v1054
        %v1238 = vunpack.c.l.b16 %v1055
        %v1239 = vunpack.c.h.b16 %v1055
        %v1240 = vunpack.c.l.b16 %v1056
        %v1241 = vunpack.c.h.b16 %v1056
        %v1242 = vunpack.c.l.b16 %v1057
        %v1243 = vunpack.c.h.b16 %v1057
        %v1244 = vunpack.c.l.b16 %v1058
        %v1245 = vunpack.c.h.b16 %v1058
        %v1246 = vunpack.c.l.b16 %v1059
        %v1247 = vunpack.c.h.b16 %v1059
        %v1248 = vunpack.c.l.b16 %v1060
        %v1249 = vunpack.c.h.b16 %v1060
        %v1250 = vunpack.c.l.b16 %v1061
        %v1251 = vunpack.c.h.b16 %v1061
        %v1252 = vunpack.c.l.b16 %v1062
        %v1253 = vunpack.c.h.b16 %v1062
        %v1254 = vunpack.c.l.b16 %v1063
        %v1255 = vunpack.c.h.b16 %v1063
        %v1256 = vunpack.c.l.b16 %v1064
        %v1257 = vunpack.c.h.b16 %v1064
        %v1258 = vunpack.c.l.b16 %v1065
        %v1259 = vunpack.c.h.b16 %v1065
        %v1260 = vunpack.c.l.b16 %v1066
        %v1261 = vunpack.c.h.b16 %v1066
        %v1262 = vunpack.c.l.b16 %v1067
        %v1263 = vunpack.c.h.b16 %v1067
        %v1264 = vunpack.c.l.b16 %v1068
        %v1265 = vunpack.c.h.b16 %v1068
        %v1266 = vunpack.c.l.b16 %v1069
        %v1267 = vunpack.c.h.b16 %v1069
        %v1268 = vunpack.c.l.b16 %v1070
        %v1269 = vunpack.c.h.b16 %v1070
        %v1270 = vunpack.c.l.b16 %v1071
        %v1271 = vunpack.c.h.b16 %v1071
        %v1272 = vunpack.c.l.b16 %v1072
        %v1273 = vunpack.c.h.b16 %v1072
        %v1274 = vunpack.c.l.b16 %v1073
        %v1275 = vunpack.c.h.b16 %v1073
        %v1276 = vunpack.c.l.b16 %v1074
        %v1277 = vunpack.c.h.b16 %v1074
        %v1278 = vunpack.c.l.b16 %v1075
        %v1279 = vunpack.c.h.b16 %v1075
        %v1280 = vunpack.c.l.b16 %v1076
        %v1281 = vunpack.c.h.b16 %v1076
        %v1282 = vunpack.c.l.b16 %v1077
        %v1283 = vunpack.c.h.b16 %v1077
        %v1284 = vunpack.c.l.b16 %v1078
        %v1285 = vunpack.c.h.b16 %v1078
        %v1286 = vunpack.c.l.b16 %v1079
        %v1287 = vunpack.c.h.b16 %v1079
        %v1288 = vunpack.c.l.b16 %v1080
        %v1289 = vunpack.c.h.b16 %v1080
        %v1290 = vunpack.c.l.b16 %v1081
        %v1291 = vunpack.c.h.b16 %v1081
        %v1292 = vpack.c.b16 %v1172, %v1164
        %v1293 = vpack.c.b16 %v1173, %v1165
        %v1294 = vpack.c.b16 %v1174, %v1166
        %v1295 = vpack.c.b16 %v1175, %v1167
        %v1296 = vpack.c.b16 %v1176, %v1168
        %v1297 = vpack.c.b16 %v1177, %v1169
        %v1298 = vpack.c.b16 %v1178, %v1170
        %v1299 = vpack.c.b16 %v1179, %v1171
        %v1300 = vpack.c.b16 %v1188, %v1180
        %v1301 = vpack.c.b16 %v1189, %v1181
        %v1302 = vpack.c.b16 %v1190, %v1182
        %v1303 = vpack.c.b16 %v1191, %v1183
        %v1304 = vpack.c.b16 %v1192, %v1184
        %v1305 = vpack.c.b16 %v1193, %v1185
        %v1306 = vpack.c.b16 %v1194, %v1186
        %v1307 = vpack.c.b16 %v1195, %v1187
        %v1308 = vpack.c.b16 %v1204, %v1196
        %v1309 = vpack.c.b16 %v1205, %v1197
        %v1310 = vpack.c.b16 %v1206, %v1198
        %v1311 = vpack.c.b16 %v1207, %v1199
        %v1312 = vpack.c.b16 %v1208, %v1200
        %v1313 = vpack.c.b16 %v1209, %v1201
        %v1314 = vpack.c.b16 %v1210, %v1202
        %v1315 = vpack.c.b16 %v1211, %v1203
        %v1316 = vpack.c.b16 %v1220, %v1212
        %v1317 = vpack.c.b16 %v1221, %v1213
        %v1318 = vpack.c.b16 %v1222, %v1214
        %v1319 = vpack.c.b16 %v1223, %v1215
        %v1320 = vpack.c.b16 %v1224, %v1216
        %v1321 = vpack.c.b16 %v1225, %v1217
        %v1322 = vpack.c.b16 %v1226, %v1218
        %v1323 = vpack.c.b16 %v1227, %v1219
        %v1324 = vpack.c.b16 %v1236, %v1228
        %v1325 = vpack.c.b16 %v1237, %v1229
        %v1326 = vpack.c.b16 %v1238, %v1230
        %v1327 = vpack.c.b16 %v1239, %v1231
        %v1328 = vpack.c.b16 %v1240, %v1232
        %v1329 = vpack.c.b16 %v1241, %v1233
        %v1330 = vpack.c.b16 %v1242, %v1234
        %v1331 = vpack.c.b16 %v1243, %v1235
        %v1332 = vpack.c.b16 %v1252, %v1244
        %v1333 = vpack.c.b16 %v1253, %v1245
        %v1334 = vpack.c.b16 %v1254, %v1246
        %v1335 = vpack.c.b16 %v1255, %v1247
        %v1336 = vpack.c.b16 %v1256, %v1248
        %v1337 = vpack.c.b16 %v1257, %v1249
        %v1338 = vpack.c.b16 %v1258, %v1250
        %v1339 = vpack.c.b16 %v1259, %v1251
        %v1340 = vpack.c.b16 %v1268, %v1260
        %v1341 = vpack.c.b16 %v1269, %v1261
        %v1342 = vpack.c.b16 %v1270, %v1262
        %v1343 = vpack.c.b16 %v1271, %v1263
        %v1344 = vpack.c.b16 %v1272, %v1264
        %v1345 = vpack.c.b16 %v1273, %v1265
        %v1346 = vpack.c.b16 %v1274, %v1266
        %v1347 = vpack.c.b16 %v1275, %v1267
        %v1348 = vpack.c.b16 %v1284, %v1276
        %v1349 = vpack.c.b16 %v1285, %v1277
        %v1350 = vpack.c.b16 %v1286, %v1278
        %v1351 = vpack.c.b16 %v1287, %v1279
        %v1352 = vpack.c.b16 %v1288, %v1280
        %v1353 = vpack.c.b16 %v1289, %v1281
        %v1354 = vpack.c.b16 %v1290, %v1282
        %v1355 = vpack.c.b16 %v1291, %v1283
        %1420 = vmatpush.bf16.msra.mxu0 %v1348
        %1421 = vmatpush.bf16.msra.mxu0 %v1340
        %1422 = vmatpush.bf16.msra.mxu0 %v1332
        %1423 = vmatpush.bf16.msra.mxu0 %v1324
        %1424 = vmatpush.bf16.msra.mxu0 %v1316
        %1425 = vmatpush.bf16.msra.mxu0 %v1308
        %1426 = vmatpush.bf16.msra.mxu0 %v1300
        %1427 = vmatpush.bf16.msra.mxu0 %v1292
        %1428 = vmatmul.bf16.gmra.mxu0 %v1002
        %v1429 = vpop.f32.mrf.mxu0
        %v1430 = vadd.f32 %v1084, %v1429
        %v1431 = vpop.f32.mrf.mxu0
        %v1432 = vadd.f32 %v1084, %v1431
        %1433 = vmatmul.bf16.gmra.mxu0 %v1003
        %v1434 = vpop.f32.mrf.mxu0
        %v1435 = vadd.f32 %v1084, %v1434
        %v1436 = vpop.f32.mrf.mxu0
        %v1437 = vadd.f32 %v1084, %v1436
        %1438 = vmatmul.bf16.gmra.mxu0 %v1004
        %v1439 = vpop.f32.mrf.mxu0
        %v1440 = vadd.f32 %v1084, %v1439
        %v1441 = vpop.f32.mrf.mxu0
        %v1442 = vadd.f32 %v1084, %v1441
        %1443 = vmatmul.bf16.gmra.mxu0 %v1005
        %v1444 = vpop.f32.mrf.mxu0
        %v1445 = vadd.f32 %v1084, %v1444
        %v1446 = vpop.f32.mrf.mxu0
        %v1447 = vadd.f32 %v1084, %v1446
        %1448 = vmatmul.bf16.gmra.mxu0 %v1006
        %v1449 = vpop.f32.mrf.mxu0
        %v1450 = vadd.f32 %v1084, %v1449
        %v1451 = vpop.f32.mrf.mxu0
        %v1452 = vadd.f32 %v1084, %v1451
        %1453 = vmatmul.bf16.gmra.mxu0 %v1007
        %v1454 = vpop.f32.mrf.mxu0
        %v1455 = vadd.f32 %v1084, %v1454
        %v1456 = vpop.f32.mrf.mxu0
        %v1457 = vadd.f32 %v1084, %v1456
        %1458 = vmatmul.bf16.gmra.mxu0 %v1008
        %v1459 = vpop.f32.mrf.mxu0
        %v1460 = vadd.f32 %v1084, %v1459
        %v1461 = vpop.f32.mrf.mxu0
        %v1462 = vadd.f32 %v1084, %v1461
        %1463 = vmatmul.bf16.gmra.mxu0 %v1009
        %v1464 = vpop.f32.mrf.mxu0
        %v1465 = vadd.f32 %v1084, %v1464
        %v1466 = vpop.f32.mrf.mxu0
        %v1467 = vadd.f32 %v1084, %v1466
        %1468 = vmatmul.bf16.gmra.mxu0 %v1010
        %v1469 = vpop.f32.mrf.mxu0
        %v1470 = vadd.f32 %v1084, %v1469
        %v1471 = vpop.f32.mrf.mxu0
        %v1472 = vadd.f32 %v1084, %v1471
        %1473 = vmatmul.bf16.gmra.mxu0 %v1011
        %v1474 = vpop.f32.mrf.mxu0
        %v1475 = vadd.f32 %v1084, %v1474
        %v1476 = vpop.f32.mrf.mxu0
        %v1477 = vadd.f32 %v1084, %v1476
        %1478 = vmatmul.bf16.gmra.mxu0 %v1012
        %v1479 = vpop.f32.mrf.mxu0
        %v1480 = vadd.f32 %v1084, %v1479
        %v1481 = vpop.f32.mrf.mxu0
        %v1482 = vadd.f32 %v1084, %v1481
        %1483 = vmatmul.bf16.gmra.mxu0 %v1013
        %v1484 = vpop.f32.mrf.mxu0
        %v1485 = vadd.f32 %v1084, %v1484
        %v1486 = vpop.f32.mrf.mxu0
        %v1487 = vadd.f32 %v1084, %v1486
        %1488 = vmatmul.bf16.gmra.mxu0 %v1014
        %v1489 = vpop.f32.mrf.mxu0
        %v1490 = vadd.f32 %v1084, %v1489
        %v1491 = vpop.f32.mrf.mxu0
        %v1492 = vadd.f32 %v1084, %v1491
        %1493 = vmatmul.bf16.gmra.mxu0 %v1015
        %v1494 = vpop.f32.mrf.mxu0
        %v1495 = vadd.f32 %v1084, %v1494
        %v1496 = vpop.f32.mrf.mxu0
        %v1497 = vadd.f32 %v1084, %v1496
        %1498 = vmatmul.bf16.gmra.mxu0 %v1016
        %v1499 = vpop.f32.mrf.mxu0
        %v1500 = vadd.f32 %v1084, %v1499
        %v1501 = vpop.f32.mrf.mxu0
        %v1502 = vadd.f32 %v1084, %v1501
        %1503 = vmatmul.bf16.gmra.mxu0 %v1017
        %v1504 = vpop.f32.mrf.mxu0
        %v1505 = vadd.f32 %v1084, %v1504
        %v1506 = vpop.f32.mrf.mxu0
        %v1507 = vadd.f32 %v1084, %v1506
        %1508 = vdwg.mxu0
        %1509 = vmatpush.bf16.msra.mxu0 %v1349
        %1510 = vmatpush.bf16.msra.mxu0 %v1341
        %1511 = vmatpush.bf16.msra.mxu0 %v1333
        %1512 = vmatpush.bf16.msra.mxu0 %v1325
        %1513 = vmatpush.bf16.msra.mxu0 %v1317
        %1514 = vmatpush.bf16.msra.mxu0 %v1309
        %1515 = vmatpush.bf16.msra.mxu0 %v1301
        %1516 = vmatpush.bf16.msra.mxu0 %v1293
        %1517 = vmatmul.bf16.gmra.mxu0 %v1002
        %v1518 = vpop.f32.mrf.mxu0
        %v1519 = vadd.f32 %v1085, %v1518
        %v1520 = vpop.f32.mrf.mxu0
        %v1521 = vadd.f32 %v1085, %v1520
        %1522 = vmatmul.bf16.gmra.mxu0 %v1003
        %v1523 = vpop.f32.mrf.mxu0
        %v1524 = vadd.f32 %v1085, %v1523
        %v1525 = vpop.f32.mrf.mxu0
        %v1526 = vadd.f32 %v1085, %v1525
        %1527 = vmatmul.bf16.gmra.mxu0 %v1004
        %v1528 = vpop.f32.mrf.mxu0
        %v1529 = vadd.f32 %v1085, %v1528
        %v1530 = vpop.f32.mrf.mxu0
        %v1531 = vadd.f32 %v1085, %v1530
        %1532 = vmatmul.bf16.gmra.mxu0 %v1005
        %v1533 = vpop.f32.mrf.mxu0
        %v1534 = vadd.f32 %v1085, %v1533
        %v1535 = vpop.f32.mrf.mxu0
        %v1536 = vadd.f32 %v1085, %v1535
        %1537 = vmatmul.bf16.gmra.mxu0 %v1006
        %v1538 = vpop.f32.mrf.mxu0
        %v1539 = vadd.f32 %v1085, %v1538
        %v1540 = vpop.f32.mrf.mxu0
        %v1541 = vadd.f32 %v1085, %v1540
        %1542 = vmatmul.bf16.gmra.mxu0 %v1007
        %v1543 = vpop.f32.mrf.mxu0
        %v1544 = vadd.f32 %v1085, %v1543
        %v1545 = vpop.f32.mrf.mxu0
        %v1546 = vadd.f32 %v1085, %v1545
        %1547 = vmatmul.bf16.gmra.mxu0 %v1008
        %v1548 = vpop.f32.mrf.mxu0
        %v1549 = vadd.f32 %v1085, %v1548
        %v1550 = vpop.f32.mrf.mxu0
        %v1551 = vadd.f32 %v1085, %v1550
        %1552 = vmatmul.bf16.gmra.mxu0 %v1009
        %v1553 = vpop.f32.mrf.mxu0
        %v1554 = vadd.f32 %v1085, %v1553
        %v1555 = vpop.f32.mrf.mxu0
        %v1556 = vadd.f32 %v1085, %v1555
        %1557 = vmatmul.bf16.gmra.mxu0 %v1010
        %v1558 = vpop.f32.mrf.mxu0
        %v1559 = vadd.f32 %v1085, %v1558
        %v1560 = vpop.f32.mrf.mxu0
        %v1561 = vadd.f32 %v1085, %v1560
        %1562 = vmatmul.bf16.gmra.mxu0 %v1011
        %v1563 = vpop.f32.mrf.mxu0
        %v1564 = vadd.f32 %v1085, %v1563
        %v1565 = vpop.f32.mrf.mxu0
        %v1566 = vadd.f32 %v1085, %v1565
        %1567 = vmatmul.bf16.gmra.mxu0 %v1012
        %v1568 = vpop.f32.mrf.mxu0
        %v1569 = vadd.f32 %v1085, %v1568
        %v1570 = vpop.f32.mrf.mxu0
        %v1571 = vadd.f32 %v1085, %v1570
        %1572 = vmatmul.bf16.gmra.mxu0 %v1013
        %v1573 = vpop.f32.mrf.mxu0
        %v1574 = vadd.f32 %v1085, %v1573
        %v1575 = vpop.f32.mrf.mxu0
        %v1576 = vadd.f32 %v1085, %v1575
        %1577 = vmatmul.bf16.gmra.mxu0 %v1014
        %v1578 = vpop.f32.mrf.mxu0
        %v1579 = vadd.f32 %v1085, %v1578
        %v1580 = vpop.f32.mrf.mxu0
        %v1581 = vadd.f32 %v1085, %v1580
        %1582 = vmatmul.bf16.gmra.mxu0 %v1015
        %v1583 = vpop.f32.mrf.mxu0
        %v1584 = vadd.f32 %v1085, %v1583
        %v1585 = vpop.f32.mrf.mxu0
        %v1586 = vadd.f32 %v1085, %v1585
        %1587 = vmatmul.bf16.gmra.mxu0 %v1016
        %v1588 = vpop.f32.mrf.mxu0
        %v1589 = vadd.f32 %v1085, %v1588
        %v1590 = vpop.f32.mrf.mxu0
        %v1591 = vadd.f32 %v1085, %v1590
        %1592 = vmatmul.bf16.gmra.mxu0 %v1017
        %v1593 = vpop.f32.mrf.mxu0
        %v1594 = vadd.f32 %v1085, %v1593
        %v1595 = vpop.f32.mrf.mxu0
        %v1596 = vadd.f32 %v1085, %v1595
        %1597 = vdwg.mxu0
        %1598 = vmatpush.bf16.msra.mxu0 %v1350
        %1599 = vmatpush.bf16.msra.mxu0 %v1342
        %1600 = vmatpush.bf16.msra.mxu0 %v1334
        %1601 = vmatpush.bf16.msra.mxu0 %v1326
        %1602 = vmatpush.bf16.msra.mxu0 %v1318
        %1603 = vmatpush.bf16.msra.mxu0 %v1310
        %1604 = vmatpush.bf16.msra.mxu0 %v1302
        %1605 = vmatpush.bf16.msra.mxu0 %v1294
        %1606 = vmatmul.bf16.gmra.mxu0 %v1002
        %v1607 = vpop.f32.mrf.mxu0
        %v1608 = vadd.f32 %v1086, %v1607
        %v1609 = vpop.f32.mrf.mxu0
        %v1610 = vadd.f32 %v1086, %v1609
        %1611 = vmatmul.bf16.gmra.mxu0 %v1003
        %v1612 = vpop.f32.mrf.mxu0
        %v1613 = vadd.f32 %v1086, %v1612
        %v1614 = vpop.f32.mrf.mxu0
        %v1615 = vadd.f32 %v1086, %v1614
        %1616 = vmatmul.bf16.gmra.mxu0 %v1004
        %v1617 = vpop.f32.mrf.mxu0
        %v1618 = vadd.f32 %v1086, %v1617
        %v1619 = vpop.f32.mrf.mxu0
        %v1620 = vadd.f32 %v1086, %v1619
        %1621 = vmatmul.bf16.gmra.mxu0 %v1005
        %v1622 = vpop.f32.mrf.mxu0
        %v1623 = vadd.f32 %v1086, %v1622
        %v1624 = vpop.f32.mrf.mxu0
        %v1625 = vadd.f32 %v1086, %v1624
        %1626 = vmatmul.bf16.gmra.mxu0 %v1006
        %v1627 = vpop.f32.mrf.mxu0
        %v1628 = vadd.f32 %v1086, %v1627
        %v1629 = vpop.f32.mrf.mxu0
        %v1630 = vadd.f32 %v1086, %v1629
        %1631 = vmatmul.bf16.gmra.mxu0 %v1007
        %v1632 = vpop.f32.mrf.mxu0
        %v1633 = vadd.f32 %v1086, %v1632
        %v1634 = vpop.f32.mrf.mxu0
        %v1635 = vadd.f32 %v1086, %v1634
        %1636 = vmatmul.bf16.gmra.mxu0 %v1008
        %v1637 = vpop.f32.mrf.mxu0
        %v1638 = vadd.f32 %v1086, %v1637
        %v1639 = vpop.f32.mrf.mxu0
        %v1640 = vadd.f32 %v1086, %v1639
        %1641 = vmatmul.bf16.gmra.mxu0 %v1009
        %v1642 = vpop.f32.mrf.mxu0
        %v1643 = vadd.f32 %v1086, %v1642
        %v1644 = vpop.f32.mrf.mxu0
        %v1645 = vadd.f32 %v1086, %v1644
        %1646 = vmatmul.bf16.gmra.mxu0 %v1010
        %v1647 = vpop.f32.mrf.mxu0
        %v1648 = vadd.f32 %v1086, %v1647
        %v1649 = vpop.f32.mrf.mxu0
        %v1650 = vadd.f32 %v1086, %v1649
        %1651 = vmatmul.bf16.gmra.mxu0 %v1011
        %v1652 = vpop.f32.mrf.mxu0
        %v1653 = vadd.f32 %v1086, %v1652
        %v1654 = vpop.f32.mrf.mxu0
        %v1655 = vadd.f32 %v1086, %v1654
        %1656 = vmatmul.bf16.gmra.mxu0 %v1012
        %v1657 = vpop.f32.mrf.mxu0
        %v1658 = vadd.f32 %v1086, %v1657
        %v1659 = vpop.f32.mrf.mxu0
        %v1660 = vadd.f32 %v1086, %v1659
        %1661 = vmatmul.bf16.gmra.mxu0 %v1013
        %v1662 = vpop.f32.mrf.mxu0
        %v1663 = vadd.f32 %v1086, %v1662
        %v1664 = vpop.f32.mrf.mxu0
        %v1665 = vadd.f32 %v1086, %v1664
        %1666 = vmatmul.bf16.gmra.mxu0 %v1014
        %v1667 = vpop.f32.mrf.mxu0
        %v1668 = vadd.f32 %v1086, %v1667
        %v1669 = vpop.f32.mrf.mxu0
        %v1670 = vadd.f32 %v1086, %v1669
        %1671 = vmatmul.bf16.gmra.mxu0 %v1015
        %v1672 = vpop.f32.mrf.mxu0
        %v1673 = vadd.f32 %v1086, %v1672
        %v1674 = vpop.f32.mrf.mxu0
        %v1675 = vadd.f32 %v1086, %v1674
        %1676 = vmatmul.bf16.gmra.mxu0 %v1016
        %v1677 = vpop.f32.mrf.mxu0
        %v1678 = vadd.f32 %v1086, %v1677
        %v1679 = vpop.f32.mrf.mxu0
        %v1680 = vadd.f32 %v1086, %v1679
        %1681 = vmatmul.bf16.gmra.mxu0 %v1017
        %v1682 = vpop.f32.mrf.mxu0
        %v1683 = vadd.f32 %v1086, %v1682
        %v1684 = vpop.f32.mrf.mxu0
        %v1685 = vadd.f32 %v1086, %v1684
        %1686 = vdwg.mxu0
        %1687 = vmatpush.bf16.msra.mxu0 %v1351
        %1688 = vmatpush.bf16.msra.mxu0 %v1343
        %1689 = vmatpush.bf16.msra.mxu0 %v1335
        %1690 = vmatpush.bf16.msra.mxu0 %v1327
        %1691 = vmatpush.bf16.msra.mxu0 %v1319
        %1692 = vmatpush.bf16.msra.mxu0 %v1311
        %1693 = vmatpush.bf16.msra.mxu0 %v1303
        %1694 = vmatpush.bf16.msra.mxu0 %v1295
        %1695 = vmatmul.bf16.gmra.mxu0 %v1002
        %v1696 = vpop.f32.mrf.mxu0
        %v1697 = vadd.f32 %v1087, %v1696
        %v1698 = vpop.f32.mrf.mxu0
        %v1699 = vadd.f32 %v1087, %v1698
        %1700 = vmatmul.bf16.gmra.mxu0 %v1003
        %v1701 = vpop.f32.mrf.mxu0
        %v1702 = vadd.f32 %v1087, %v1701
        %v1703 = vpop.f32.mrf.mxu0
        %v1704 = vadd.f32 %v1087, %v1703
        %1705 = vmatmul.bf16.gmra.mxu0 %v1004
        %v1706 = vpop.f32.mrf.mxu0
        %v1707 = vadd.f32 %v1087, %v1706
        %v1708 = vpop.f32.mrf.mxu0
        %v1709 = vadd.f32 %v1087, %v1708
        %1710 = vmatmul.bf16.gmra.mxu0 %v1005
        %v1711 = vpop.f32.mrf.mxu0
        %v1712 = vadd.f32 %v1087, %v1711
        %v1713 = vpop.f32.mrf.mxu0
        %v1714 = vadd.f32 %v1087, %v1713
        %1715 = vmatmul.bf16.gmra.mxu0 %v1006
        %v1716 = vpop.f32.mrf.mxu0
        %v1717 = vadd.f32 %v1087, %v1716
        %v1718 = vpop.f32.mrf.mxu0
        %v1719 = vadd.f32 %v1087, %v1718
        %1720 = vmatmul.bf16.gmra.mxu0 %v1007
        %v1721 = vpop.f32.mrf.mxu0
        %v1722 = vadd.f32 %v1087, %v1721
        %v1723 = vpop.f32.mrf.mxu0
        %v1724 = vadd.f32 %v1087, %v1723
        %1725 = vmatmul.bf16.gmra.mxu0 %v1008
        %v1726 = vpop.f32.mrf.mxu0
        %v1727 = vadd.f32 %v1087, %v1726
        %v1728 = vpop.f32.mrf.mxu0
        %v1729 = vadd.f32 %v1087, %v1728
        %1730 = vmatmul.bf16.gmra.mxu0 %v1009
        %v1731 = vpop.f32.mrf.mxu0
        %v1732 = vadd.f32 %v1087, %v1731
        %v1733 = vpop.f32.mrf.mxu0
        %v1734 = vadd.f32 %v1087, %v1733
        %1735 = vmatmul.bf16.gmra.mxu0 %v1010
        %v1736 = vpop.f32.mrf.mxu0
        %v1737 = vadd.f32 %v1087, %v1736
        %v1738 = vpop.f32.mrf.mxu0
        %v1739 = vadd.f32 %v1087, %v1738
        %1740 = vmatmul.bf16.gmra.mxu0 %v1011
        %v1741 = vpop.f32.mrf.mxu0
        %v1742 = vadd.f32 %v1087, %v1741
        %v1743 = vpop.f32.mrf.mxu0
        %v1744 = vadd.f32 %v1087, %v1743
        %1745 = vmatmul.bf16.gmra.mxu0 %v1012
        %v1746 = vpop.f32.mrf.mxu0
        %v1747 = vadd.f32 %v1087, %v1746
        %v1748 = vpop.f32.mrf.mxu0
        %v1749 = vadd.f32 %v1087, %v1748
        %1750 = vmatmul.bf16.gmra.mxu0 %v1013
        %v1751 = vpop.f32.mrf.mxu0
        %v1752 = vadd.f32 %v1087, %v1751
        %v1753 = vpop.f32.mrf.mxu0
        %v1754 = vadd.f32 %v1087, %v1753
        %1755 = vmatmul.bf16.gmra.mxu0 %v1014
        %v1756 = vpop.f32.mrf.mxu0
        %v1757 = vadd.f32 %v1087, %v1756
        %v1758 = vpop.f32.mrf.mxu0
        %v1759 = vadd.f32 %v1087, %v1758
        %1760 = vmatmul.bf16.gmra.mxu0 %v1015
        %v1761 = vpop.f32.mrf.mxu0
        %v1762 = vadd.f32 %v1087, %v1761
        %v1763 = vpop.f32.mrf.mxu0
        %v1764 = vadd.f32 %v1087, %v1763
        %1765 = vmatmul.bf16.gmra.mxu0 %v1016
        %v1766 = vpop.f32.mrf.mxu0
        %v1767 = vadd.f32 %v1087, %v1766
        %v1768 = vpop.f32.mrf.mxu0
        %v1769 = vadd.f32 %v1087, %v1768
        %1770 = vmatmul.bf16.gmra.mxu0 %v1017
        %v1771 = vpop.f32.mrf.mxu0
        %v1772 = vadd.f32 %v1087, %v1771
        %v1773 = vpop.f32.mrf.mxu0
        %v1774 = vadd.f32 %v1087, %v1773
        %1775 = vdwg.mxu0
        %1776 = vmatpush.bf16.msra.mxu0 %v1352
        %1777 = vmatpush.bf16.msra.mxu0 %v1344
        %1778 = vmatpush.bf16.msra.mxu0 %v1336
        %1779 = vmatpush.bf16.msra.mxu0 %v1328
        %1780 = vmatpush.bf16.msra.mxu0 %v1320
        %1781 = vmatpush.bf16.msra.mxu0 %v1312
        %1782 = vmatpush.bf16.msra.mxu0 %v1304
        %1783 = vmatpush.bf16.msra.mxu0 %v1296
        %1784 = vmatmul.bf16.gmra.mxu0 %v1002
        %v1785 = vpop.f32.mrf.mxu0
        %v1786 = vadd.f32 %v1088, %v1785
        %v1787 = vpop.f32.mrf.mxu0
        %v1788 = vadd.f32 %v1088, %v1787
        %1789 = vmatmul.bf16.gmra.mxu0 %v1003
        %v1790 = vpop.f32.mrf.mxu0
        %v1791 = vadd.f32 %v1088, %v1790
        %v1792 = vpop.f32.mrf.mxu0
        %v1793 = vadd.f32 %v1088, %v1792
        %1794 = vmatmul.bf16.gmra.mxu0 %v1004
        %v1795 = vpop.f32.mrf.mxu0
        %v1796 = vadd.f32 %v1088, %v1795
        %v1797 = vpop.f32.mrf.mxu0
        %v1798 = vadd.f32 %v1088, %v1797
        %1799 = vmatmul.bf16.gmra.mxu0 %v1005
        %v1800 = vpop.f32.mrf.mxu0
        %v1801 = vadd.f32 %v1088, %v1800
        %v1802 = vpop.f32.mrf.mxu0
        %v1803 = vadd.f32 %v1088, %v1802
        %1804 = vmatmul.bf16.gmra.mxu0 %v1006
        %v1805 = vpop.f32.mrf.mxu0
        %v1806 = vadd.f32 %v1088, %v1805
        %v1807 = vpop.f32.mrf.mxu0
        %v1808 = vadd.f32 %v1088, %v1807
        %1809 = vmatmul.bf16.gmra.mxu0 %v1007
        %v1810 = vpop.f32.mrf.mxu0
        %v1811 = vadd.f32 %v1088, %v1810
        %v1812 = vpop.f32.mrf.mxu0
        %v1813 = vadd.f32 %v1088, %v1812
        %1814 = vmatmul.bf16.gmra.mxu0 %v1008
        %v1815 = vpop.f32.mrf.mxu0
        %v1816 = vadd.f32 %v1088, %v1815
        %v1817 = vpop.f32.mrf.mxu0
        %v1818 = vadd.f32 %v1088, %v1817
        %1819 = vmatmul.bf16.gmra.mxu0 %v1009
        %v1820 = vpop.f32.mrf.mxu0
        %v1821 = vadd.f32 %v1088, %v1820
        %v1822 = vpop.f32.mrf.mxu0
        %v1823 = vadd.f32 %v1088, %v1822
        %1824 = vmatmul.bf16.gmra.mxu0 %v1010
        %v1825 = vpop.f32.mrf.mxu0
        %v1826 = vadd.f32 %v1088, %v1825
        %v1827 = vpop.f32.mrf.mxu0
        %v1828 = vadd.f32 %v1088, %v1827
        %1829 = vmatmul.bf16.gmra.mxu0 %v1011
        %v1830 = vpop.f32.mrf.mxu0
        %v1831 = vadd.f32 %v1088, %v1830
        %v1832 = vpop.f32.mrf.mxu0
        %v1833 = vadd.f32 %v1088, %v1832
        %1834 = vmatmul.bf16.gmra.mxu0 %v1012
        %v1835 = vpop.f32.mrf.mxu0
        %v1836 = vadd.f32 %v1088, %v1835
        %v1837 = vpop.f32.mrf.mxu0
        %v1838 = vadd.f32 %v1088, %v1837
        %1839 = vmatmul.bf16.gmra.mxu0 %v1013
        %v1840 = vpop.f32.mrf.mxu0
        %v1841 = vadd.f32 %v1088, %v1840
        %v1842 = vpop.f32.mrf.mxu0
        %v1843 = vadd.f32 %v1088, %v1842
        %1844 = vmatmul.bf16.gmra.mxu0 %v1014
        %v1845 = vpop.f32.mrf.mxu0
        %v1846 = vadd.f32 %v1088, %v1845
        %v1847 = vpop.f32.mrf.mxu0
        %v1848 = vadd.f32 %v1088, %v1847
        %1849 = vmatmul.bf16.gmra.mxu0 %v1015
        %v1850 = vpop.f32.mrf.mxu0
        %v1851 = vadd.f32 %v1088, %v1850
        %v1852 = vpop.f32.mrf.mxu0
        %v1853 = vadd.f32 %v1088, %v1852
        %1854 = vmatmul.bf16.gmra.mxu0 %v1016
        %v1855 = vpop.f32.mrf.mxu0
        %v1856 = vadd.f32 %v1088, %v1855
        %v1857 = vpop.f32.mrf.mxu0
        %v1858 = vadd.f32 %v1088, %v1857
        %1859 = vmatmul.bf16.gmra.mxu0 %v1017
        %v1860 = vpop.f32.mrf.mxu0
        %v1861 = vadd.f32 %v1088, %v1860
        %v1862 = vpop.f32.mrf.mxu0
        %v1863 = vadd.f32 %v1088, %v1862
        %1864 = vdwg.mxu0
        %1865 = vmatpush.bf16.msra.mxu0 %v1353
        %1866 = vmatpush.bf16.msra.mxu0 %v1345
        %1867 = vmatpush.bf16.msra.mxu0 %v1337
        %1868 = vmatpush.bf16.msra.mxu0 %v1329
        %1869 = vmatpush.bf16.msra.mxu0 %v1321
        %1870 = vmatpush.bf16.msra.mxu0 %v1313
        %1871 = vmatpush.bf16.msra.mxu0 %v1305
        %1872 = vmatpush.bf16.msra.mxu0 %v1297
        %1873 = vmatmul.bf16.gmra.mxu0 %v1002
        %v1874 = vpop.f32.mrf.mxu0
        %v1875 = vadd.f32 %v1089, %v1874
        %v1876 = vpop.f32.mrf.mxu0
        %v1877 = vadd.f32 %v1089, %v1876
        %1878 = vmatmul.bf16.gmra.mxu0 %v1003
        %v1879 = vpop.f32.mrf.mxu0
        %v1880 = vadd.f32 %v1089, %v1879
        %v1881 = vpop.f32.mrf.mxu0
        %v1882 = vadd.f32 %v1089, %v1881
        %1883 = vmatmul.bf16.gmra.mxu0 %v1004
        %v1884 = vpop.f32.mrf.mxu0
        %v1885 = vadd.f32 %v1089, %v1884
        %v1886 = vpop.f32.mrf.mxu0
        %v1887 = vadd.f32 %v1089, %v1886
        %1888 = vmatmul.bf16.gmra.mxu0 %v1005
        %v1889 = vpop.f32.mrf.mxu0
        %v1890 = vadd.f32 %v1089, %v1889
        %v1891 = vpop.f32.mrf.mxu0
        %v1892 = vadd.f32 %v1089, %v1891
        %1893 = vmatmul.bf16.gmra.mxu0 %v1006
        %v1894 = vpop.f32.mrf.mxu0
        %v1895 = vadd.f32 %v1089, %v1894
        %v1896 = vpop.f32.mrf.mxu0
        %v1897 = vadd.f32 %v1089, %v1896
        %1898 = vmatmul.bf16.gmra.mxu0 %v1007
        %v1899 = vpop.f32.mrf.mxu0
        %v1900 = vadd.f32 %v1089, %v1899
        %v1901 = vpop.f32.mrf.mxu0
        %v1902 = vadd.f32 %v1089, %v1901
        %1903 = vmatmul.bf16.gmra.mxu0 %v1008
        %v1904 = vpop.f32.mrf.mxu0
        %v1905 = vadd.f32 %v1089, %v1904
        %v1906 = vpop.f32.mrf.mxu0
        %v1907 = vadd.f32 %v1089, %v1906
        %1908 = vmatmul.bf16.gmra.mxu0 %v1009
        %v1909 = vpop.f32.mrf.mxu0
        %v1910 = vadd.f32 %v1089, %v1909
        %v1911 = vpop.f32.mrf.mxu0
        %v1912 = vadd.f32 %v1089, %v1911
        %1913 = vmatmul.bf16.gmra.mxu0 %v1010
        %v1914 = vpop.f32.mrf.mxu0
        %v1915 = vadd.f32 %v1089, %v1914
        %v1916 = vpop.f32.mrf.mxu0
        %v1917 = vadd.f32 %v1089, %v1916
        %1918 = vmatmul.bf16.gmra.mxu0 %v1011
        %v1919 = vpop.f32.mrf.mxu0
        %v1920 = vadd.f32 %v1089, %v1919
        %v1921 = vpop.f32.mrf.mxu0
        %v1922 = vadd.f32 %v1089, %v1921
        %1923 = vmatmul.bf16.gmra.mxu0 %v1012
        %v1924 = vpop.f32.mrf.mxu0
        %v1925 = vadd.f32 %v1089, %v1924
        %v1926 = vpop.f32.mrf.mxu0
        %v1927 = vadd.f32 %v1089, %v1926
        %1928 = vmatmul.bf16.gmra.mxu0 %v1013
        %v1929 = vpop.f32.mrf.mxu0
        %v1930 = vadd.f32 %v1089, %v1929
        %v1931 = vpop.f32.mrf.mxu0
        %v1932 = vadd.f32 %v1089, %v1931
        %1933 = vmatmul.bf16.gmra.mxu0 %v1014
        %v1934 = vpop.f32.mrf.mxu0
        %v1935 = vadd.f32 %v1089, %v1934
        %v1936 = vpop.f32.mrf.mxu0
        %v1937 = vadd.f32 %v1089, %v1936
        %1938 = vmatmul.bf16.gmra.mxu0 %v1015
        %v1939 = vpop.f32.mrf.mxu0
        %v1940 = vadd.f32 %v1089, %v1939
        %v1941 = vpop.f32.mrf.mxu0
        %v1942 = vadd.f32 %v1089, %v1941
        %1943 = vmatmul.bf16.gmra.mxu0 %v1016
        %v1944 = vpop.f32.mrf.mxu0
        %v1945 = vadd.f32 %v1089, %v1944
        %v1946 = vpop.f32.mrf.mxu0
        %v1947 = vadd.f32 %v1089, %v1946
        %1948 = vmatmul.bf16.gmra.mxu0 %v1017
        %v1949 = vpop.f32.mrf.mxu0
        %v1950 = vadd.f32 %v1089, %v1949
        %v1951 = vpop.f32.mrf.mxu0
        %v1952 = vadd.f32 %v1089, %v1951
        %1953 = vdwg.mxu0
        %1954 = vmatpush.bf16.msra.mxu0 %v1354
        %1955 = vmatpush.bf16.msra.mxu0 %v1346
        %1956 = vmatpush.bf16.msra.mxu0 %v1338
        %1957 = vmatpush.bf16.msra.mxu0 %v1330
        %1958 = vmatpush.bf16.msra.mxu0 %v1322
        %1959 = vmatpush.bf16.msra.mxu0 %v1314
        %1960 = vmatpush.bf16.msra.mxu0 %v1306
        %1961 = vmatpush.bf16.msra.mxu0 %v1298
        %1962 = vmatmul.bf16.gmra.mxu0 %v1002
        %v1963 = vpop.f32.mrf.mxu0
        %v1964 = vadd.f32 %v1090, %v1963
        %v1965 = vpop.f32.mrf.mxu0
        %v1966 = vadd.f32 %v1090, %v1965
        %1967 = vmatmul.bf16.gmra.mxu0 %v1003
        %v1968 = vpop.f32.mrf.mxu0
        %v1969 = vadd.f32 %v1090, %v1968
        %v1970 = vpop.f32.mrf.mxu0
        %v1971 = vadd.f32 %v1090, %v1970
        %1972 = vmatmul.bf16.gmra.mxu0 %v1004
        %v1973 = vpop.f32.mrf.mxu0
        %v1974 = vadd.f32 %v1090, %v1973
        %v1975 = vpop.f32.mrf.mxu0
        %v1976 = vadd.f32 %v1090, %v1975
        %1977 = vmatmul.bf16.gmra.mxu0 %v1005
        %v1978 = vpop.f32.mrf.mxu0
        %v1979 = vadd.f32 %v1090, %v1978
        %v1980 = vpop.f32.mrf.mxu0
        %v1981 = vadd.f32 %v1090, %v1980
        %1982 = vmatmul.bf16.gmra.mxu0 %v1006
        %v1983 = vpop.f32.mrf.mxu0
        %v1984 = vadd.f32 %v1090, %v1983
        %v1985 = vpop.f32.mrf.mxu0
        %v1986 = vadd.f32 %v1090, %v1985
        %1987 = vmatmul.bf16.gmra.mxu0 %v1007
        %v1988 = vpop.f32.mrf.mxu0
        %v1989 = vadd.f32 %v1090, %v1988
        %v1990 = vpop.f32.mrf.mxu0
        %v1991 = vadd.f32 %v1090, %v1990
        %1992 = vmatmul.bf16.gmra.mxu0 %v1008
        %v1993 = vpop.f32.mrf.mxu0
        %v1994 = vadd.f32 %v1090, %v1993
        %v1995 = vpop.f32.mrf.mxu0
        %v1996 = vadd.f32 %v1090, %v1995
        %1997 = vmatmul.bf16.gmra.mxu0 %v1009
        %v1998 = vpop.f32.mrf.mxu0
        %v1999 = vadd.f32 %v1090, %v1998
        %v2000 = vpop.f32.mrf.mxu0
        %v2001 = vadd.f32 %v1090, %v2000
        %2002 = vmatmul.bf16.gmra.mxu0 %v1010
        %v2003 = vpop.f32.mrf.mxu0
        %v2004 = vadd.f32 %v1090, %v2003
        %v2005 = vpop.f32.mrf.mxu0
        %v2006 = vadd.f32 %v1090, %v2005
        %2007 = vmatmul.bf16.gmra.mxu0 %v1011
        %v2008 = vpop.f32.mrf.mxu0
        %v2009 = vadd.f32 %v1090, %v2008
        %v2010 = vpop.f32.mrf.mxu0
        %v2011 = vadd.f32 %v1090, %v2010
        %2012 = vmatmul.bf16.gmra.mxu0 %v1012
        %v2013 = vpop.f32.mrf.mxu0
        %v2014 = vadd.f32 %v1090, %v2013
        %v2015 = vpop.f32.mrf.mxu0
        %v2016 = vadd.f32 %v1090, %v2015
        %2017 = vmatmul.bf16.gmra.mxu0 %v1013
        %v2018 = vpop.f32.mrf.mxu0
        %v2019 = vadd.f32 %v1090, %v2018
        %v2020 = vpop.f32.mrf.mxu0
        %v2021 = vadd.f32 %v1090, %v2020
        %2022 = vmatmul.bf16.gmra.mxu0 %v1014
        %v2023 = vpop.f32.mrf.mxu0
        %v2024 = vadd.f32 %v1090, %v2023
        %v2025 = vpop.f32.mrf.mxu0
        %v2026 = vadd.f32 %v1090, %v2025
        %2027 = vmatmul.bf16.gmra.mxu0 %v1015
        %v2028 = vpop.f32.mrf.mxu0
        %v2029 = vadd.f32 %v1090, %v2028
        %v2030 = vpop.f32.mrf.mxu0
        %v2031 = vadd.f32 %v1090, %v2030
        %2032 = vmatmul.bf16.gmra.mxu0 %v1016
        %v2033 = vpop.f32.mrf.mxu0
        %v2034 = vadd.f32 %v1090, %v2033
        %v2035 = vpop.f32.mrf.mxu0
        %v2036 = vadd.f32 %v1090, %v2035
        %2037 = vmatmul.bf16.gmra.mxu0 %v1017
        %v2038 = vpop.f32.mrf.mxu0
        %v2039 = vadd.f32 %v1090, %v2038
        %v2040 = vpop.f32.mrf.mxu0
        %v2041 = vadd.f32 %v1090, %v2040
        %2042 = vdwg.mxu0
        %2043 = vmatpush.bf16.msra.mxu0 %v1355
        %2044 = vmatpush.bf16.msra.mxu0 %v1347
        %2045 = vmatpush.bf16.msra.mxu0 %v1339
        %2046 = vmatpush.bf16.msra.mxu0 %v1331
        %2047 = vmatpush.bf16.msra.mxu0 %v1323
        %2048 = vmatpush.bf16.msra.mxu0 %v1315
        %2049 = vmatpush.bf16.msra.mxu0 %v1307
        %2050 = vmatpush.bf16.msra.mxu0 %v1299
        %2051 = vmatmul.bf16.gmra.mxu0 %v1002
        %v2052 = vpop.f32.mrf.mxu0
        %v2053 = vadd.f32 %v1091, %v2052
        %v2054 = vpop.f32.mrf.mxu0
        %v2055 = vadd.f32 %v1091, %v2054
        %2056 = vmatmul.bf16.gmra.mxu0 %v1003
        %v2057 = vpop.f32.mrf.mxu0
        %v2058 = vadd.f32 %v1091, %v2057
        %v2059 = vpop.f32.mrf.mxu0
        %v2060 = vadd.f32 %v1091, %v2059
        %2061 = vmatmul.bf16.gmra.mxu0 %v1004
        %v2062 = vpop.f32.mrf.mxu0
        %v2063 = vadd.f32 %v1091, %v2062
        %v2064 = vpop.f32.mrf.mxu0
        %v2065 = vadd.f32 %v1091, %v2064
        %2066 = vmatmul.bf16.gmra.mxu0 %v1005
        %v2067 = vpop.f32.mrf.mxu0
        %v2068 = vadd.f32 %v1091, %v2067
        %v2069 = vpop.f32.mrf.mxu0
        %v2070 = vadd.f32 %v1091, %v2069
        %2071 = vmatmul.bf16.gmra.mxu0 %v1006
        %v2072 = vpop.f32.mrf.mxu0
        %v2073 = vadd.f32 %v1091, %v2072
        %v2074 = vpop.f32.mrf.mxu0
        %v2075 = vadd.f32 %v1091, %v2074
        %2076 = vmatmul.bf16.gmra.mxu0 %v1007
        %v2077 = vpop.f32.mrf.mxu0
        %v2078 = vadd.f32 %v1091, %v2077
        %v2079 = vpop.f32.mrf.mxu0
        %v2080 = vadd.f32 %v1091, %v2079
        %2081 = vmatmul.bf16.gmra.mxu0 %v1008
        %v2082 = vpop.f32.mrf.mxu0
        %v2083 = vadd.f32 %v1091, %v2082
        %v2084 = vpop.f32.mrf.mxu0
        %v2085 = vadd.f32 %v1091, %v2084
        %2086 = vmatmul.bf16.gmra.mxu0 %v1009
        %v2087 = vpop.f32.mrf.mxu0
        %v2088 = vadd.f32 %v1091, %v2087
        %v2089 = vpop.f32.mrf.mxu0
        %v2090 = vadd.f32 %v1091, %v2089
        %2091 = vmatmul.bf16.gmra.mxu0 %v1010
        %v2092 = vpop.f32.mrf.mxu0
        %v2093 = vadd.f32 %v1091, %v2092
        %v2094 = vpop.f32.mrf.mxu0
        %v2095 = vadd.f32 %v1091, %v2094
        %2096 = vmatmul.bf16.gmra.mxu0 %v1011
        %v2097 = vpop.f32.mrf.mxu0
        %v2098 = vadd.f32 %v1091, %v2097
        %v2099 = vpop.f32.mrf.mxu0
        %v2100 = vadd.f32 %v1091, %v2099
        %2101 = vmatmul.bf16.gmra.mxu0 %v1012
        %v2102 = vpop.f32.mrf.mxu0
        %v2103 = vadd.f32 %v1091, %v2102
        %v2104 = vpop.f32.mrf.mxu0
        %v2105 = vadd.f32 %v1091, %v2104
        %2106 = vmatmul.bf16.gmra.mxu0 %v1013
        %v2107 = vpop.f32.mrf.mxu0
        %v2108 = vadd.f32 %v1091, %v2107
        %v2109 = vpop.f32.mrf.mxu0
        %v2110 = vadd.f32 %v1091, %v2109
        %2111 = vmatmul.bf16.gmra.mxu0 %v1014
        %v2112 = vpop.f32.mrf.mxu0
        %v2113 = vadd.f32 %v1091, %v2112
        %v2114 = vpop.f32.mrf.mxu0
        %v2115 = vadd.f32 %v1091, %v2114
        %2116 = vmatmul.bf16.gmra.mxu0 %v1015
        %v2117 = vpop.f32.mrf.mxu0
        %v2118 = vadd.f32 %v1091, %v2117
        %v2119 = vpop.f32.mrf.mxu0
        %v2120 = vadd.f32 %v1091, %v2119
        %2121 = vmatmul.bf16.gmra.mxu0 %v1016
        %v2122 = vpop.f32.mrf.mxu0
        %v2123 = vadd.f32 %v1091, %v2122
        %v2124 = vpop.f32.mrf.mxu0
        %v2125 = vadd.f32 %v1091, %v2124
        %2126 = vmatmul.bf16.gmra.mxu0 %v1017
        %v2127 = vpop.f32.mrf.mxu0
        %v2128 = vadd.f32 %v1091, %v2127
        %v2129 = vpop.f32.mrf.mxu0
        %v2130 = vadd.f32 %v1091, %v2129
        %2131 = vdwg.mxu0
        %v2132 = vpack.c.bf16 %v1519, %v1430
        %v2133 = vpack.c.bf16 %v1697, %v1608
        %v2134 = vpack.c.bf16 %v1875, %v1786
        %v2135 = vpack.c.bf16 %v2053, %v1964
        %v2136 = vpack.c.bf16 %v1521, %v1432
        %v2137 = vpack.c.bf16 %v1699, %v1610
        %v2138 = vpack.c.bf16 %v1877, %v1788
        %v2139 = vpack.c.bf16 %v2055, %v1966
        %v2140 = vpack.c.bf16 %v1524, %v1435
        %v2141 = vpack.c.bf16 %v1702, %v1613
        %v2142 = vpack.c.bf16 %v1880, %v1791
        %v2143 = vpack.c.bf16 %v2058, %v1969
        %v2144 = vpack.c.bf16 %v1526, %v1437
        %v2145 = vpack.c.bf16 %v1704, %v1615
        %v2146 = vpack.c.bf16 %v1882, %v1793
        %v2147 = vpack.c.bf16 %v2060, %v1971
        %v2148 = vpack.c.bf16 %v1529, %v1440
        %v2149 = vpack.c.bf16 %v1707, %v1618
        %v2150 = vpack.c.bf16 %v1885, %v1796
        %v2151 = vpack.c.bf16 %v2063, %v1974
        %v2152 = vpack.c.bf16 %v1531, %v1442
        %v2153 = vpack.c.bf16 %v1709, %v1620
        %v2154 = vpack.c.bf16 %v1887, %v1798
        %v2155 = vpack.c.bf16 %v2065, %v1976
        %v2156 = vpack.c.bf16 %v1534, %v1445
        %v2157 = vpack.c.bf16 %v1712, %v1623
        %v2158 = vpack.c.bf16 %v1890, %v1801
        %v2159 = vpack.c.bf16 %v2068, %v1979
        %v2160 = vpack.c.bf16 %v1536, %v1447
        %v2161 = vpack.c.bf16 %v1714, %v1625
        %v2162 = vpack.c.bf16 %v1892, %v1803
        %v2163 = vpack.c.bf16 %v2070, %v1981
        %v2164 = vpack.c.bf16 %v1539, %v1450
        %v2165 = vpack.c.bf16 %v1717, %v1628
        %v2166 = vpack.c.bf16 %v1895, %v1806
        %v2167 = vpack.c.bf16 %v2073, %v1984
        %v2168 = vpack.c.bf16 %v1541, %v1452
        %v2169 = vpack.c.bf16 %v1719, %v1630
        %v2170 = vpack.c.bf16 %v1897, %v1808
        %v2171 = vpack.c.bf16 %v2075, %v1986
        %v2172 = vpack.c.bf16 %v1544, %v1455
        %v2173 = vpack.c.bf16 %v1722, %v1633
        %v2174 = vpack.c.bf16 %v1900, %v1811
        %v2175 = vpack.c.bf16 %v2078, %v1989
        %v2176 = vpack.c.bf16 %v1546, %v1457
        %v2177 = vpack.c.bf16 %v1724, %v1635
        %v2178 = vpack.c.bf16 %v1902, %v1813
        %v2179 = vpack.c.bf16 %v2080, %v1991
        %v2180 = vpack.c.bf16 %v1549, %v1460
        %v2181 = vpack.c.bf16 %v1727, %v1638
        %v2182 = vpack.c.bf16 %v1905, %v1816
        %v2183 = vpack.c.bf16 %v2083, %v1994
        %v2184 = vpack.c.bf16 %v1551, %v1462
        %v2185 = vpack.c.bf16 %v1729, %v1640
        %v2186 = vpack.c.bf16 %v1907, %v1818
        %v2187 = vpack.c.bf16 %v2085, %v1996
        %v2188 = vpack.c.bf16 %v1554, %v1465
        %v2189 = vpack.c.bf16 %v1732, %v1643
        %v2190 = vpack.c.bf16 %v1910, %v1821
        %v2191 = vpack.c.bf16 %v2088, %v1999
        %v2192 = vpack.c.bf16 %v1556, %v1467
        %v2193 = vpack.c.bf16 %v1734, %v1645
        %v2194 = vpack.c.bf16 %v1912, %v1823
        %v2195 = vpack.c.bf16 %v2090, %v2001
        %v2196 = vpack.c.bf16 %v1559, %v1470
        %v2197 = vpack.c.bf16 %v1737, %v1648
        %v2198 = vpack.c.bf16 %v1915, %v1826
        %v2199 = vpack.c.bf16 %v2093, %v2004
        %v2200 = vpack.c.bf16 %v1561, %v1472
        %v2201 = vpack.c.bf16 %v1739, %v1650
        %v2202 = vpack.c.bf16 %v1917, %v1828
        %v2203 = vpack.c.bf16 %v2095, %v2006
        %v2204 = vpack.c.bf16 %v1564, %v1475
        %v2205 = vpack.c.bf16 %v1742, %v1653
        %v2206 = vpack.c.bf16 %v1920, %v1831
        %v2207 = vpack.c.bf16 %v2098, %v2009
        %v2208 = vpack.c.bf16 %v1566, %v1477
        %v2209 = vpack.c.bf16 %v1744, %v1655
        %v2210 = vpack.c.bf16 %v1922, %v1833
        %v2211 = vpack.c.bf16 %v2100, %v2011
        %v2212 = vpack.c.bf16 %v1569, %v1480
        %v2213 = vpack.c.bf16 %v1747, %v1658
        %v2214 = vpack.c.bf16 %v1925, %v1836
        %v2215 = vpack.c.bf16 %v2103, %v2014
        %v2216 = vpack.c.bf16 %v1571, %v1482
        %v2217 = vpack.c.bf16 %v1749, %v1660
        %v2218 = vpack.c.bf16 %v1927, %v1838
        %v2219 = vpack.c.bf16 %v2105, %v2016
        %v2220 = vpack.c.bf16 %v1574, %v1485
        %v2221 = vpack.c.bf16 %v1752, %v1663
        %v2222 = vpack.c.bf16 %v1930, %v1841
        %v2223 = vpack.c.bf16 %v2108, %v2019
        %v2224 = vpack.c.bf16 %v1576, %v1487
        %v2225 = vpack.c.bf16 %v1754, %v1665
        %v2226 = vpack.c.bf16 %v1932, %v1843
        %v2227 = vpack.c.bf16 %v2110, %v2021
        %v2228 = vpack.c.bf16 %v1579, %v1490
        %v2229 = vpack.c.bf16 %v1757, %v1668
        %v2230 = vpack.c.bf16 %v1935, %v1846
        %v2231 = vpack.c.bf16 %v2113, %v2024
        %v2232 = vpack.c.bf16 %v1581, %v1492
        %v2233 = vpack.c.bf16 %v1759, %v1670
        %v2234 = vpack.c.bf16 %v1937, %v1848
        %v2235 = vpack.c.bf16 %v2115, %v2026
        %v2236 = vpack.c.bf16 %v1584, %v1495
        %v2237 = vpack.c.bf16 %v1762, %v1673
        %v2238 = vpack.c.bf16 %v1940, %v1851
        %v2239 = vpack.c.bf16 %v2118, %v2029
        %v2240 = vpack.c.bf16 %v1586, %v1497
        %v2241 = vpack.c.bf16 %v1764, %v1675
        %v2242 = vpack.c.bf16 %v1942, %v1853
        %v2243 = vpack.c.bf16 %v2120, %v2031
        %v2244 = vpack.c.bf16 %v1589, %v1500
        %v2245 = vpack.c.bf16 %v1767, %v1678
        %v2246 = vpack.c.bf16 %v1945, %v1856
        %v2247 = vpack.c.bf16 %v2123, %v2034
        %v2248 = vpack.c.bf16 %v1591, %v1502
        %v2249 = vpack.c.bf16 %v1769, %v1680
        %v2250 = vpack.c.bf16 %v1947, %v1858
        %v2251 = vpack.c.bf16 %v2125, %v2036
        %v2252 = vpack.c.bf16 %v1594, %v1505
        %v2253 = vpack.c.bf16 %v1772, %v1683
        %v2254 = vpack.c.bf16 %v1950, %v1861
        %v2255 = vpack.c.bf16 %v2128, %v2039
        %v2256 = vpack.c.bf16 %v1596, %v1507
        %v2257 = vpack.c.bf16 %v1774, %v1685
        %v2258 = vpack.c.bf16 %v1952, %v1863
        %v2259 = vpack.c.bf16 %v2130, %v2041
        %2260 = vst [vmem:[%s289] sm:$0xff] %v2132
        %2261 = vst [vmem:[%s289 + $0x8] sm:$0xff] %v2133
        %2262 = vst [vmem:[%s289 + $0x10] sm:$0xff] %v2134
        %2263 = vst [vmem:[%s289 + $0x18] sm:$0xff] %v2135
        %2264 = vst [vmem:[%s289 + $0x20] sm:$0xff] %v2136
        %2265 = vst [vmem:[%s289 + $0x28] sm:$0xff] %v2137
        %2266 = vst [vmem:[%s289 + $0x30] sm:$0xff] %v2138
        %2267 = vst [vmem:[%s289 + $0x38] sm:$0xff] %v2139
        %2268 = vst [vmem:[%s289 + $0x40] sm:$0xff] %v2140
        %2269 = vst [vmem:[%s289 + $0x48] sm:$0xff] %v2141
        %2270 = vst [vmem:[%s289 + $0x50] sm:$0xff] %v2142
        %2271 = vst [vmem:[%s289 + $0x58] sm:$0xff] %v2143
        %2272 = vst [vmem:[%s289 + $0x60] sm:$0xff] %v2144
        %2273 = vst [vmem:[%s289 + $0x68] sm:$0xff] %v2145
        %2274 = vst [vmem:[%s289 + $0x70] sm:$0xff] %v2146
        %2275 = vst [vmem:[%s289 + $0x78] sm:$0xff] %v2147
        %2276 = vst [vmem:[%s289 + $0x80] sm:$0xff] %v2148
        %2277 = vst [vmem:[%s289 + $0x88] sm:$0xff] %v2149
        %2278 = vst [vmem:[%s289 + $0x90] sm:$0xff] %v2150
        %2279 = vst [vmem:[%s289 + $0x98] sm:$0xff] %v2151
        %2280 = vst [vmem:[%s289 + $0xa0] sm:$0xff] %v2152
        %2281 = vst [vmem:[%s289 + $0xa8] sm:$0xff] %v2153
        %2282 = vst [vmem:[%s289 + $0xb0] sm:$0xff] %v2154
        %2283 = vst [vmem:[%s289 + $0xb8] sm:$0xff] %v2155
        %2284 = vst [vmem:[%s289 + $0xc0] sm:$0xff] %v2156
        %2285 = vst [vmem:[%s289 + $0xc8] sm:$0xff] %v2157
        %2286 = vst [vmem:[%s289 + $0xd0] sm:$0xff] %v2158
        %2287 = vst [vmem:[%s289 + $0xd8] sm:$0xff] %v2159
        %2288 = vst [vmem:[%s289 + $0xe0] sm:$0xff] %v2160
        %2289 = vst [vmem:[%s289 + $0xe8] sm:$0xff] %v2161
        %2290 = vst [vmem:[%s289 + $0xf0] sm:$0xff] %v2162
        %2291 = vst [vmem:[%s289 + $0xf8] sm:$0xff] %v2163
        %2292 = vst [vmem:[%s289 + $0x100] sm:$0xff] %v2164
        %2293 = vst [vmem:[%s289 + $0x108] sm:$0xff] %v2165
        %2294 = vst [vmem:[%s289 + $0x110] sm:$0xff] %v2166
        %2295 = vst [vmem:[%s289 + $0x118] sm:$0xff] %v2167
        %2296 = vst [vmem:[%s289 + $0x120] sm:$0xff] %v2168
        %2297 = vst [vmem:[%s289 + $0x128] sm:$0xff] %v2169
        %2298 = vst [vmem:[%s289 + $0x130] sm:$0xff] %v2170
        %2299 = vst [vmem:[%s289 + $0x138] sm:$0xff] %v2171
        %2300 = vst [vmem:[%s289 + $0x140] sm:$0xff] %v2172
        %2301 = vst [vmem:[%s289 + $0x148] sm:$0xff] %v2173
        %2302 = vst [vmem:[%s289 + $0x150] sm:$0xff] %v2174
        %2303 = vst [vmem:[%s289 + $0x158] sm:$0xff] %v2175
        %2304 = vst [vmem:[%s289 + $0x160] sm:$0xff] %v2176
        %2305 = vst [vmem:[%s289 + $0x168] sm:$0xff] %v2177
        %2306 = vst [vmem:[%s289 + $0x170] sm:$0xff] %v2178
        %2307 = vst [vmem:[%s289 + $0x178] sm:$0xff] %v2179
        %2308 = vst [vmem:[%s289 + $0x180] sm:$0xff] %v2180
        %2309 = vst [vmem:[%s289 + $0x188] sm:$0xff] %v2181
        %2310 = vst [vmem:[%s289 + $0x190] sm:$0xff] %v2182
        %2311 = vst [vmem:[%s289 + $0x198] sm:$0xff] %v2183
        %2312 = vst [vmem:[%s289 + $0x1a0] sm:$0xff] %v2184
        %2313 = vst [vmem:[%s289 + $0x1a8] sm:$0xff] %v2185
        %2314 = vst [vmem:[%s289 + $0x1b0] sm:$0xff] %v2186
        %2315 = vst [vmem:[%s289 + $0x1b8] sm:$0xff] %v2187
        %2316 = vst [vmem:[%s289 + $0x1c0] sm:$0xff] %v2188
        %2317 = vst [vmem:[%s289 + $0x1c8] sm:$0xff] %v2189
        %2318 = vst [vmem:[%s289 + $0x1d0] sm:$0xff] %v2190
        %2319 = vst [vmem:[%s289 + $0x1d8] sm:$0xff] %v2191
        %2320 = vst [vmem:[%s289 + $0x1e0] sm:$0xff] %v2192
        %2321 = vst [vmem:[%s289 + $0x1e8] sm:$0xff] %v2193
        %2322 = vst [vmem:[%s289 + $0x1f0] sm:$0xff] %v2194
        %2323 = vst [vmem:[%s289 + $0x1f8] sm:$0xff] %v2195
        %2324 = vst [vmem:[%s289 + $0x200] sm:$0xff] %v2196
        %2325 = vst [vmem:[%s289 + $0x208] sm:$0xff] %v2197
        %2326 = vst [vmem:[%s289 + $0x210] sm:$0xff] %v2198
        %2327 = vst [vmem:[%s289 + $0x218] sm:$0xff] %v2199
        %2328 = vst [vmem:[%s289 + $0x220] sm:$0xff] %v2200
        %2329 = vst [vmem:[%s289 + $0x228] sm:$0xff] %v2201
        %2330 = vst [vmem:[%s289 + $0x230] sm:$0xff] %v2202
        %2331 = vst [vmem:[%s289 + $0x238] sm:$0xff] %v2203
        %2332 = vst [vmem:[%s289 + $0x240] sm:$0xff] %v2204
        %2333 = vst [vmem:[%s289 + $0x248] sm:$0xff] %v2205
        %2334 = vst [vmem:[%s289 + $0x250] sm:$0xff] %v2206
        %2335 = vst [vmem:[%s289 + $0x258] sm:$0xff] %v2207
        %2336 = vst [vmem:[%s289 + $0x260] sm:$0xff] %v2208
        %2337 = vst [vmem:[%s289 + $0x268] sm:$0xff] %v2209
        %2338 = vst [vmem:[%s289 + $0x270] sm:$0xff] %v2210
        %2339 = vst [vmem:[%s289 + $0x278] sm:$0xff] %v2211
        %2340 = vst [vmem:[%s289 + $0x280] sm:$0xff] %v2212
        %2341 = vst [vmem:[%s289 + $0x288] sm:$0xff] %v2213
        %2342 = vst [vmem:[%s289 + $0x290] sm:$0xff] %v2214
        %2343 = vst [vmem:[%s289 + $0x298] sm:$0xff] %v2215
        %2344 = vst [vmem:[%s289 + $0x2a0] sm:$0xff] %v2216
        %2345 = vst [vmem:[%s289 + $0x2a8] sm:$0xff] %v2217
        %2346 = vst [vmem:[%s289 + $0x2b0] sm:$0xff] %v2218
        %2347 = vst [vmem:[%s289 + $0x2b8] sm:$0xff] %v2219
        %2348 = vst [vmem:[%s289 + $0x2c0] sm:$0xff] %v2220
        %2349 = vst [vmem:[%s289 + $0x2c8] sm:$0xff] %v2221
        %2350 = vst [vmem:[%s289 + $0x2d0] sm:$0xff] %v2222
        %2351 = vst [vmem:[%s289 + $0x2d8] sm:$0xff] %v2223
        %2352 = vst [vmem:[%s289 + $0x2e0] sm:$0xff] %v2224
        %2353 = vst [vmem:[%s289 + $0x2e8] sm:$0xff] %v2225
        %2354 = vst [vmem:[%s289 + $0x2f0] sm:$0xff] %v2226
        %2355 = vst [vmem:[%s289 + $0x2f8] sm:$0xff] %v2227
        %2356 = vst [vmem:[%s289 + $0x300] sm:$0xff] %v2228
        %2357 = vst [vmem:[%s289 + $0x308] sm:$0xff] %v2229
        %2358 = vst [vmem:[%s289 + $0x310] sm:$0xff] %v2230
        %2359 = vst [vmem:[%s289 + $0x318] sm:$0xff] %v2231
        %2360 = vst [vmem:[%s289 + $0x320] sm:$0xff] %v2232
        %2361 = vst [vmem:[%s289 + $0x328] sm:$0xff] %v2233
        %2362 = vst [vmem:[%s289 + $0x330] sm:$0xff] %v2234
        %2363 = vst [vmem:[%s289 + $0x338] sm:$0xff] %v2235
        %2364 = vst [vmem:[%s289 + $0x340] sm:$0xff] %v2236
        %2365 = vst [vmem:[%s289 + $0x348] sm:$0xff] %v2237
        %2366 = vst [vmem:[%s289 + $0x350] sm:$0xff] %v2238
        %2367 = vst [vmem:[%s289 + $0x358] sm:$0xff] %v2239
        %2368 = vst [vmem:[%s289 + $0x360] sm:$0xff] %v2240
        %2369 = vst [vmem:[%s289 + $0x368] sm:$0xff] %v2241
        %2370 = vst [vmem:[%s289 + $0x370] sm:$0xff] %v2242
        %2371 = vst [vmem:[%s289 + $0x378] sm:$0xff] %v2243
        %2372 = vst [vmem:[%s289 + $0x380] sm:$0xff] %v2244
        %2373 = vst [vmem:[%s289 + $0x388] sm:$0xff] %v2245
        %2374 = vst [vmem:[%s289 + $0x390] sm:$0xff] %v2246
        %2375 = vst [vmem:[%s289 + $0x398] sm:$0xff] %v2247
        %2376 = vst [vmem:[%s289 + $0x3a0] sm:$0xff] %v2248
        %2377 = vst [vmem:[%s289 + $0x3a8] sm:$0xff] %v2249
        %2378 = vst [vmem:[%s289 + $0x3b0] sm:$0xff] %v2250
        %2379 = vst [vmem:[%s289 + $0x3b8] sm:$0xff] %v2251
        %2380 = vst [vmem:[%s289 + $0x3c0] sm:$0xff] %v2252
        %2381 = vst [vmem:[%s289 + $0x3c8] sm:$0xff] %v2253
        %2382 = vst [vmem:[%s289 + $0x3d0] sm:$0xff] %v2254
        %2383 = vst [vmem:[%s289 + $0x3d8] sm:$0xff] %v2255
        %2384 = vst [vmem:[%s289 + $0x3e0] sm:$0xff] %v2256
        %2385 = vst [vmem:[%s289 + $0x3e8] sm:$0xff] %v2257
        %2386 = vst [vmem:[%s289 + $0x3f0] sm:$0xff] %v2258
        %2387 = vst [vmem:[%s289 + $0x3f8] sm:$0xff] %v2259
        %s2388 = sand.u32 %s182, 1
        %s2389 = scalar_lea.sflag [#allocation4], %s2388
        %s2390 = sand.u32 %s182, 1
        %s2391 = smul.addr %s2390, 1024
        %s2392 = scalar_lea.vmem [#allocation5], %s2391
        // Predicated region
        $region53: #{tpu_custom_call.1} parent=47 // pred_check
          %p2393 = pneg %p192
        $region54: #{tpu_custom_call.1} parent=47 // pred_check_branch
          %2395 = sbr.rel (%p2393) target = $region56
        $region55: #{tpu_custom_call.1} parent=47 // pred_region
          %s2396 = smul.u32 32, %s22
          %2398 = vsyncadd %s2389, 0
          %s2399 = smul.addr %s2396, 8
          %s2400 = smul.addr %s2399, 4
          %s2401 = scalar_lea.hbm %s7, %s2400
          %s2402 = sshll.u32 %s2392, 4
          %s2403 = int_to_ptr.vmem [resolvable:$true] %s2402
          %s2404 = sshll.u32 %s2401, 4
          %s2405 = int_to_ptr.hbm [resolvable:$true] %s2404
          %2410 = dma.vmem_to_hbm [thread:$0]  %s2403, 16384, %s2405, %s2389, 512, 512, 32
        $region56: #{tpu_custom_call.1} parent=47 // pred_fallthru
          _
      $region48: #{tpu_custom_call.1} parent=5 // pred_fallthru
        _
      %p2411 = scmp.le.s32.totalorder 2, %s17
      // Predicated region
      $region57: #{tpu_custom_call.1} parent=5 // pred_check
        %p2412 = pneg %p2411
      $region58: #{tpu_custom_call.1} parent=5 // pred_check_branch
        %2414 = sbr.rel (%p2412) target = $region60
      $region59: #{tpu_custom_call.1} parent=5 // pred_region
        %s2415 = ssub.s32 %s17, 2
        // Predicated region
        $region61: #{tpu_custom_call.1} parent=59 // pred_check
          %p2416 = pneg %p198
        $region62: #{tpu_custom_call.1} parent=59 // pred_check_branch
          %2418 = sbr.rel (%p2416) target = $region64
        $region63: #{tpu_custom_call.1} parent=59 // pred_region
          %s2419 = sand.u32 %s183, 1
          %s2420 = scalar_lea.sflag [#allocation4], %s2419
          %s2421 = sand.u32 %s183, 1
          %s2422 = smul.addr %s2421, 1024
          %s2423 = scalar_lea.vmem [#allocation5], %s2422
          %2425 = dma.done %s2420, 16384
        $region64: #{tpu_custom_call.1} parent=59 // pred_fallthru
          _
      $region60: #{tpu_custom_call.1} parent=5 // pred_fallthru
        _
    $region6: #{tpu_custom_call.1} parent=1 // loop_footer
      %s21 = sadd.s32 1, %s17
    $region7: #{tpu_custom_call.1} parent=1 // loop_footer_branch
      %16 = sbr.rel target = $region3
    $region8: #{tpu_custom_call.1} parent=1 // loop_exit
      _
    %2426 = vsyncpa [#allocation3], 1
    %s2427 = scalar_lea.sflag [#allocation3], 1
    %2428 = vsyncpa %s2427, 1
    %2429 = vsyncpa [#allocation4], 1
    %s2430 = scalar_lea.sflag [#allocation4], 1
    %2431 = vsyncpa %s2430, 1

</llo_original>
